<compile_context>
chip_gen: v5e
topology: v5e:2x2
jax: 0.10.0
libtpu: 0.0.40
codegen_flags: <defaults>
</compile_context>

<pallas_src>
import functools

import jax
import jax.numpy as jnp
from jax import lax
from jax.experimental import pallas as pl
from jax.experimental.pallas import tpu as pltpu


@functools.lru_cache(maxsize=None)
def _vmem_limit_bytes():
    """Scoped-VMEM budget with headroom (never scope the full physical VMEM)."""
    cap = None
    try:
        cap = getattr(pltpu.get_tpu_info(), "vmem_capacity_bytes", None)
    except Exception:
        cap = None
    if not cap:
        cap = 64 * 1024 * 1024          # v7x per-TC size = smallest generation
    return int(cap) * 3 // 4            # leave ~25% for compiler scratch


def _pick_tile(n, target):
    """Largest multiple of 8 that divides n and is <= target; else n (full)."""
    best = 0
    c = 8
    while c <= min(n, target):
        if n % c == 0:
            best = c
        c += 8
    return best if best > 0 else n


# -----------------------------------------------------------------------------
# Kernel 1: softmax + embed MLP + hoisted LSTM input projection, both paths.
# Emits gx time-major and batch-padded: (tT, Bp, 4H) per tile.
# -----------------------------------------------------------------------------
def _embed_proj_kernel(dec_ref, h1t_ref, w1_ref, b1_ref, w2_ref, b2_ref,
                       wih_ref, bg_ref, gx_ref, *, batch_pad):
    """One time tile.

    dec_ref : (B, tT, V)   raw decoder logits (softmax path)
    h1t_ref : (B, tT, H)   W_emb1[tgt] (one-hot matmul replaced by gather)
    gx_ref  : (tT, Bp, 4H) time-major input-side gates x@W_ih + (b_ih+b_hh);
                           batch rows [0,B)=softmax path, [B,2B)=tgt path,
                           [2B,Bp)=zero padding.
    """
    B, tT, V = dec_ref.shape
    H = w1_ref.shape[1]
    G = wih_ref.shape[1]
    Bp = batch_pad

    w1 = w1_ref[...]
    b1 = b1_ref[...]
    w2 = w2_ref[...]
    b2 = b2_ref[...]
    wih = wih_ref[...]
    bg = bg_ref[...]

    # --- softmax path; normalization deferred past the first matmul:
    # softmax(x) @ W1 == (exp(x - max) @ W1) * (1 / sum(exp)).
    # Replaces a V-wide VALU divide with an H-wide scale and drops one
    # V-sized temporary.
    x = dec_ref[...].astype(jnp.float32)
    x = x - jnp.max(x, axis=-1, keepdims=True)
    ex = jnp.exp(x)
    inv_s = pl.reciprocal(jnp.sum(ex, axis=-1, keepdims=True), approx=False)
    h_s = jnp.dot(ex.reshape(B * tT, V), w1, preferred_element_type=jnp.float32)
    h_s = h_s * inv_s.reshape(B * tT, 1) + b1
    h_s = jnp.where(h_s > 1e-6, h_s, 0.0)            # nn.Threshold(1e-06, 0)

    # --- tgt path: one_hot @ W_emb1 was a row gather done outside ---
    h_t = h1t_ref[...].reshape(B * tT, H) + b1
    h_t = jnp.where(h_t > 1e-6, h_t, 0.0)

    # --- shared tail: both paths stacked -> one tall MXU matmul chain:
    # Linear(H,E)+Threshold, then the hoisted LSTM input projection.
    hh = jnp.concatenate([h_s, h_t], axis=0)          # (2*B*tT, H)
    ee = jnp.dot(hh, w2, preferred_element_type=jnp.float32) + b2
    ee = jnp.where(ee > 1e-6, ee, 0.0)
    gg = jnp.dot(ee, wih, preferred_element_type=jnp.float32) + bg   # (2*B*tT, G)

    # Reorder the small (., 4H) result to time-major and pad the batch inside
    # the kernel: this removes the standalone XLA pad+transpose HBM round-trip
    # over gx.  gg rows are ordered (path, batch, time), so every (path,batch)
    # pair is a contiguous, already time-ordered (tT, G) slab.
    for p in range(2):
        for b in range(B):
            row = p * B + b
            slab = gg[row * tT:(row + 1) * tT, :]                  # (tT, G)
            gx_ref[:, row:row + 1, :] = slab.reshape(tT, 1, G)
    if Bp > 2 * B:
        gx_ref[:, 2 * B:, :] = jnp.zeros((tT, Bp - 2 * B, G), jnp.float32)


def embed_proj(decoder_out, h1_tgt, w1, b1, w2, b2, w_ih, b_lstm, *, batch_pad):
    B, T, V = decoder_out.shape
    H = w1.shape[1]
    G = w_ih.shape[1]
    Bp = batch_pad
    vmem_limit = _vmem_limit_bytes()

    # Time tile: big enough that the dominant (B*tT, V)@(V,H) matmul feeds the
    # 256-row MXU (B*tT >= 256 where it fits), capped by the VMEM needed for
    # the double-buffered (B,tT,V)/(B,tT,H) inputs and (tT,Bp,G) output.
    weight_bytes = 2 * 4 * sum(a.size for a in (w1, b1, w2, b2, w_ih, b_lstm))
    bytes_per_t = 2 * 4 * (B * V + B * H + Bp * G)
    cap_t = max(8, (vmem_limit * 2 // 3 - weight_bytes) // max(bytes_per_t, 1))
    tT = _pick_tile(T, max(8, min(cap_t, 256)))

    kern = functools.partial(_embed_proj_kernel, batch_pad=Bp)

    def build_and_run(buffered_weights):
        def wspec(shape):
            if buffered_weights:
                # Weights are grid-invariant: request a single VMEM buffer
                # instead of the default double-buffer (halves w1 footprint).
                return pl.BlockSpec(shape, lambda i: (0, 0),
                                    pipeline_mode=pl.Buffered(1))
            return pl.BlockSpec(shape, lambda i: (0, 0))

        return pl.pallas_call(
            kern,
            out_shape=jax.ShapeDtypeStruct((T, Bp, G), jnp.float32),
            grid=(T // tT,),
            in_specs=[
                pl.BlockSpec((B, tT, V), lambda i: (0, i, 0)),
                pl.BlockSpec((B, tT, H), lambda i: (0, i, 0)),
                wspec(w1.shape), wspec(b1.shape), wspec(w2.shape),
                wspec(b2.shape), wspec(w_ih.shape), wspec(b_lstm.shape),
            ],
            out_specs=pl.BlockSpec((tT, Bp, G), lambda i: (i, 0, 0)),
            compiler_params=pltpu.CompilerParams(
                dimension_semantics=("parallel",),
                vmem_limit_bytes=vmem_limit),
        )(decoder_out, h1_tgt, w1, b1, w2, b2, w_ih, b_lstm)

    try:
        return build_and_run(True)
    except Exception:
        # pipeline_mode=pl.Buffered(1) not supported on this jax build; fall
        # back to default (double-buffered) weights — correct, just more VMEM.
        return build_and_run(False)


# -----------------------------------------------------------------------------
# Kernel 2: LSTM recurrence over time chunks (fused padded 2B batch) + fc_out.
# Grid axis = time chunks (sequential / "arbitrary"); h/c live in VMEM scratch.
# -----------------------------------------------------------------------------
def _lstm_fc_kernel(gx_ref, whh_ref, wfc_ref, bfc_ref, out_ref, h_sc, c_sc,
                    *, hidden_size):
    """gx_ref: (Tc, Bp, 4H) time-major precomputed gates (x@W_ih + bias already
    folded in).  Only h@W_hh + gate elementwise remain per timestep.
    PyTorch gate order [i, f, g, o]."""
    c_idx = pl.program_id(0)

    @pl.when(c_idx == 0)
    def _():
        h_sc[...] = jnp.zeros_like(h_sc)
        c_sc[...] = jnp.zeros_like(c_sc)

    hs = hidden_size
    tc = gx_ref.shape[0]
    whh = whh_ref[...]                      # hoisted out of the time loop
    # TODO(synk): hold W_hh stationary in the MXU via
    # pltpu.matmul_push_rhs/matmul_acc_lhs/matmul_pop to avoid re-streaming the
    # (H,4H) weight every step of the serialized recurrence.

    def step(t, carry):
        h, c = carry
        gates = gx_ref[t] + jnp.dot(h, whh, preferred_element_type=jnp.float32)
        # i and f are contiguous -> one wider sigmoid (fewer EUP issues/step).
        if_act = jax.nn.sigmoid(gates[:, :2 * hs])
        i_g = if_act[:, :hs]
        f_g = if_act[:, hs:]
        g_g = jnp.tanh(gates[:, 2 * hs:3 * hs])
        o_g = jax.nn.sigmoid(gates[:, 3 * hs:])
        c_new = f_g * c + i_g * g_g
        h_new = o_g * jnp.tanh(c_new)
        return h_new, c_new

    # Unroll so the LLO scheduler can overlap gate math across adjacent steps
    # of the latency-bound recurrence.
    unroll = 1
    for u in (8, 4, 2):
        if tc % u == 0:
            unroll = u
            break
    h, c = lax.fori_loop(0, tc, step, (h_sc[...], c_sc[...]), unroll=unroll)
    h_sc[...] = h
    c_sc[...] = c

    @pl.when(c_idx == pl.num_programs(0) - 1)
    def _():
        out_ref[...] = (jnp.dot(h, wfc_ref[...],
                                preferred_element_type=jnp.float32)
                        + bfc_ref[...])


def lstm_fc(gx_tm, w_hh, w_fc, b_fc, *, hidden_size):
    T, Bp, G = gx_tm.shape
    out_size = w_fc.shape[1]
    # Large chunks amortize the ~0.35us/grid-step overhead, but keep >= 2
    # chunks when T is long enough so the gx DMA overlaps the fori_loop.
    if T <= 128:
        Tc = T
    else:
        Tc = _pick_tile(T, min(512, max(128, T // 2)))
    kern = functools.partial(_lstm_fc_kernel, hidden_size=hidden_size)
    return pl.pallas_call(
        kern,
        out_shape=jax.ShapeDtypeStruct((Bp, out_size), jnp.float32),
        grid=(T // Tc,),
        in_specs=[
            pl.BlockSpec((Tc, Bp, G), lambda c: (c, 0, 0)),
            pl.BlockSpec(w_hh.shape, lambda c: (0, 0)),
            pl.BlockSpec(w_fc.shape, lambda c: (0, 0)),
            pl.BlockSpec(b_fc.shape, lambda c: (0, 0)),
        ],
        out_specs=pl.BlockSpec((Bp, out_size), lambda c: (0, 0)),
        scratch_shapes=[
            pltpu.VMEM((Bp, hidden_size), jnp.float32),   # h
            pltpu.VMEM((Bp, hidden_size), jnp.float32),   # c
        ],
        compiler_params=pltpu.CompilerParams(
            dimension_semantics=("arbitrary",),
            vmem_limit_bytes=_vmem_limit_bytes()),
    )(gx_tm, w_hh, w_fc, b_fc)


# -----------------------------------------------------------------------------
# Full RecurrentDiscriminator.forward
# -----------------------------------------------------------------------------
def recurrent_discriminator_forward(params, decoder_out, tgt, *, hidden_size):
    B, T, V = decoder_out.shape
    H = hidden_size
    twoB = 2 * B
    Bp = max(8, ((twoB + 7) // 8) * 8)

    # Replace one_hot(tgt) @ W_emb1 by a row gather of W_emb1 (XLA gather).
    h1_tgt = jnp.take(params["w_emb1"], tgt.reshape(-1), axis=0).reshape(B, T, H)

    # Kernel 1: softmax + embed MLP + hoisted x@W_ih for both paths, emitted
    # directly as (T, Bp, 4H) time-major (no XLA pad/transpose round-trip).
    gx_tm = embed_proj(decoder_out, h1_tgt,
                       params["w_emb1"], params["b_emb1"],
                       params["w_emb2"], params["b_emb2"],
                       params["w_ih"], params["b_lstm"],
                       batch_pad=Bp)                             # (T, Bp, 4H)

    # Kernel 2: recurrence + fc_out on the final hidden state.
    out_all = lstm_fc(gx_tm, params["w_hh"], params["w_fc"], params["b_fc"],
                      hidden_size=H)                             # (Bp, out)

    encoded_out = out_all[:B]
    encoded_tgt = out_all[B:twoB]
    return encoded_out, encoded_tgt


# -----------------------------------------------------------------------------
# Pure-JAX reference (same math) for verification.
# -----------------------------------------------------------------------------
def reference_forward(params, decoder_out, tgt, *, hidden_size):
    V = decoder_out.shape[-1]

    def embed(x, apply_softmax):
        if apply_softmax:
            x = jax.nn.softmax(x, axis=-1)
        h = x @ params["w_emb1"] + params["b_emb1"]
        h = jnp.where(h > 1e-6, h, 0.0)
        e = h @ params["w_emb2"] + params["b_emb2"]
        return jnp.where(e > 1e-6, e, 0.0)

    def run(x_bte):
        x = x_bte.transpose(1, 0, 2)                         # (T, B, E)
        B = x.shape[1]
        h0 = jnp.zeros((B, hidden_size), jnp.float32)
        c0 = jnp.zeros((B, hidden_size), jnp.float32)

        def step(carry, x_t):
            h, c = carry
            gates = x_t @ params["w_ih"] + h @ params["w_hh"] + params["b_lstm"]
            i, f, g, o = jnp.split(gates, 4, axis=-1)
            c = jax.nn.sigmoid(f) * c + jax.nn.sigmoid(i) * jnp.tanh(g)
            h = jax.nn.sigmoid(o) * jnp.tanh(c)
            return (h, c), None

        (h, _), _ = jax.lax.scan(step, (h0, c0), x)
        return h @ params["w_fc"] + params["b_fc"]

    enc_out = run(embed(decoder_out, True))
    enc_tgt = run(embed(jax.nn.one_hot(tgt, V, dtype=jnp.float32), False))
    return enc_out, enc_tgt


# -----------------------------------------------------------------------------
# Deterministic parameter init + smoke test
# -----------------------------------------------------------------------------
def init_params(key, vocab_size, hidden_size, embedding_size, out_size):
    ks = jax.random.split(key, 9)
    s = 0.1
    return {
        "w_emb1": s * jax.random.normal(ks[0], (vocab_size, hidden_size), jnp.float32),
        "b_emb1": s * jax.random.normal(ks[1], (1, hidden_size), jnp.float32),
        "w_emb2": s * jax.random.normal(ks[2], (hidden_size, embedding_size), jnp.float32),
        "b_emb2": s * jax.random.normal(ks[3], (1, embedding_size), jnp.float32),
        # LSTM weights stored transposed vs. PyTorch: (in, 4H); gate order [i,f,g,o]
        "w_ih": s * jax.random.normal(ks[4], (embedding_size, 4 * hidden_size), jnp.float32),
        "w_hh": s * jax.random.normal(ks[5], (hidden_size, 4 * hidden_size), jnp.float32),
        "b_lstm": s * jax.random.normal(ks[6], (1, 4 * hidden_size), jnp.float32),
        "w_fc": s * jax.random.normal(ks[7], (hidden_size, out_size), jnp.float32),
        "b_fc": s * jax.random.normal(ks[8], (1, out_size), jnp.float32),
    }


if __name__ == "__main__":
    B, T = 2, 8
    VOCAB, HIDDEN, EMB, OUT = 32, 32, 32, 32

    key = jax.random.PRNGKey(0)
    k_par, k_dec, k_tgt = jax.random.split(key, 3)

    params = init_params(k_par, VOCAB, HIDDEN, EMB, OUT)
    decoder_out = jax.random.normal(k_dec, (B, T, VOCAB), jnp.float32)
    tgt = jax.random.randint(k_tgt, (B, T), 0, VOCAB, dtype=jnp.int32)

    enc_out, enc_tgt = recurrent_discriminator_forward(
        params, decoder_out, tgt, hidden_size=HIDDEN)
    jax.block_until_ready((enc_out, enc_tgt))

    ref_out, ref_tgt = reference_forward(params, decoder_out, tgt, hidden_size=HIDDEN)
    assert enc_out.shape == (B, OUT) and enc_tgt.shape == (B, OUT)
    assert jnp.allclose(enc_out, ref_out, atol=1e-4, rtol=1e-4)
    assert jnp.allclose(enc_tgt, ref_tgt, atol=1e-4, rtol=1e-4)

    print("KERNEL_OK")
</pallas_src>

<mosaic_0001>
module attributes {stable_mosaic.version = 11 : i64} {
  func.func @_embed_proj_kernel(%arg0: i32, %arg1: memref<2x8x32xf32, #tpu.memory_space<vmem>>, %arg2: memref<2x8x32xf32, #tpu.memory_space<vmem>>, %arg3: memref<32x32xf32, #tpu.memory_space<vmem>>, %arg4: memref<1x32xf32, #tpu.memory_space<vmem>>, %arg5: memref<32x32xf32, #tpu.memory_space<vmem>>, %arg6: memref<1x32xf32, #tpu.memory_space<vmem>>, %arg7: memref<32x128xf32, #tpu.memory_space<vmem>>, %arg8: memref<1x128xf32, #tpu.memory_space<vmem>>, %arg9: memref<8x8x128xf32, #tpu.memory_space<vmem>>) attributes {dimension_semantics = [#tpu.dimension_semantics<parallel>], iteration_bounds = array<i64: 1>, scalar_prefetch = 0 : i64, scratch_operands = 0 : i64, tpu.core_type = #tpu.core_type<tc>, window_params = [{transform_indices = @transform_0, window_bounds = array<i64: 2, 8, 32>}, {transform_indices = @transform_1, window_bounds = array<i64: 2, 8, 32>}, {pipeline_mode = #tpu.pipeline_mode<synchronous>, transform_indices = @transform_2, window_bounds = array<i64: 32, 32>}, {pipeline_mode = #tpu.pipeline_mode<synchronous>, transform_indices = @transform_3, window_bounds = array<i64: 1, 32>}, {pipeline_mode = #tpu.pipeline_mode<synchronous>, transform_indices = @transform_4, window_bounds = array<i64: 32, 32>}, {pipeline_mode = #tpu.pipeline_mode<synchronous>, transform_indices = @transform_5, window_bounds = array<i64: 1, 32>}, {pipeline_mode = #tpu.pipeline_mode<synchronous>, transform_indices = @transform_6, window_bounds = array<i64: 32, 128>}, {pipeline_mode = #tpu.pipeline_mode<synchronous>, transform_indices = @transform_7, window_bounds = array<i64: 1, 128>}, {transform_indices = @transform_8, window_bounds = array<i64: 8, 8, 128>}]} {
    %c0 = arith.constant 0 : index
    %c0_0 = arith.constant 0 : index
    %0 = vector.load %arg3[%c0, %c0_0] : memref<32x32xf32, #tpu.memory_space<vmem>>, vector<32x32xf32>
    %c0_1 = arith.constant 0 : index
    %c0_2 = arith.constant 0 : index
    %1 = vector.load %arg4[%c0_1, %c0_2] : memref<1x32xf32, #tpu.memory_space<vmem>>, vector<1x32xf32>
    %c0_3 = arith.constant 0 : index
    %c0_4 = arith.constant 0 : index
    %2 = vector.load %arg5[%c0_3, %c0_4] : memref<32x32xf32, #tpu.memory_space<vmem>>, vector<32x32xf32>
    %c0_5 = arith.constant 0 : index
    %c0_6 = arith.constant 0 : index
    %3 = vector.load %arg6[%c0_5, %c0_6] : memref<1x32xf32, #tpu.memory_space<vmem>>, vector<1x32xf32>
    %c0_7 = arith.constant 0 : index
    %c0_8 = arith.constant 0 : index
    %4 = vector.load %arg7[%c0_7, %c0_8] : memref<32x128xf32, #tpu.memory_space<vmem>>, vector<32x128xf32>
    %c0_9 = arith.constant 0 : index
    %c0_10 = arith.constant 0 : index
    %5 = vector.load %arg8[%c0_9, %c0_10] : memref<1x128xf32, #tpu.memory_space<vmem>>, vector<1x128xf32>
    %c0_11 = arith.constant 0 : index
    %c0_12 = arith.constant 0 : index
    %c0_13 = arith.constant 0 : index
    %6 = vector.load %arg1[%c0_11, %c0_12, %c0_13] : memref<2x8x32xf32, #tpu.memory_space<vmem>>, vector<2x8x32xf32>
    %cst = arith.constant dense<0xFF800000> : vector<2x8xf32>
    %7 = vector.multi_reduction <maximumf>, %6, %cst [2] : vector<2x8x32xf32> to vector<2x8xf32>
    %8 = vector.shape_cast %7 : vector<2x8xf32> to vector<2x8x1xf32>
    %9 = vector.broadcast %8 : vector<2x8x1xf32> to vector<2x8x32xf32>
    %10 = arith.subf %6, %9 : vector<2x8x32xf32>
    %11 = math.exp %10 : vector<2x8x32xf32>
    %cst_14 = arith.constant dense<0.000000e+00> : vector<2x8xf32>
    %12 = vector.multi_reduction <add>, %11, %cst_14 [2] : vector<2x8x32xf32> to vector<2x8xf32>
    %13 = vector.shape_cast %12 : vector<2x8xf32> to vector<2x8x1xf32>
    %14 = tpu.reciprocal %13 : vector<2x8x1xf32> -> vector<2x8x1xf32>
    %15 = vector.shape_cast %11 : vector<2x8x32xf32> to vector<16x32xf32>
    %cst_15 = arith.constant dense<0.000000e+00> : vector<16x32xf32>
    %16 = tpu.matmul %15, %0, %cst_15 {dimension_numbers = #tpu.dot_dimension_numbers<[1], [0], [0], [1], [0, 0, 1, 1], [], []>} : vector<16x32xf32>, vector<32x32xf32>, vector<16x32xf32> -> vector<16x32xf32>
    %17 = vector.shape_cast %14 : vector<2x8x1xf32> to vector<16x1xf32>
    %18 = vector.broadcast %17 : vector<16x1xf32> to vector<16x32xf32>
    %19 = arith.mulf %16, %18 : vector<16x32xf32>
    %20 = vector.broadcast %1 : vector<1x32xf32> to vector<16x32xf32>
    %21 = arith.addf %19, %20 : vector<16x32xf32>
    %cst_16 = arith.constant 9.99999997E-7 : f32
    %22 = vector.broadcast %cst_16 : f32 to vector<16x32xf32>
    %23 = arith.cmpf ogt, %21, %22 : vector<16x32xf32>
    %cst_17 = arith.constant 0.000000e+00 : f32
    %24 = vector.broadcast %cst_17 : f32 to vector<16x32xf32>
    %25 = arith.select %23, %21, %24 : vector<16x32xi1>, vector<16x32xf32>
    %c0_18 = arith.constant 0 : index
    %c0_19 = arith.constant 0 : index
    %c0_20 = arith.constant 0 : index
    %26 = vector.load %arg2[%c0_18, %c0_19, %c0_20] : memref<2x8x32xf32, #tpu.memory_space<vmem>>, vector<2x8x32xf32>
    %27 = vector.shape_cast %26 : vector<2x8x32xf32> to vector<16x32xf32>
    %28 = vector.broadcast %1 : vector<1x32xf32> to vector<16x32xf32>
    %29 = arith.addf %27, %28 : vector<16x32xf32>
    %cst_21 = arith.constant 9.99999997E-7 : f32
    %30 = vector.broadcast %cst_21 : f32 to vector<16x32xf32>
    %31 = arith.cmpf ogt, %29, %30 : vector<16x32xf32>
    %cst_22 = arith.constant 0.000000e+00 : f32
    %32 = vector.broadcast %cst_22 : f32 to vector<16x32xf32>
    %33 = arith.select %31, %29, %32 : vector<16x32xi1>, vector<16x32xf32>
    %34 = tpu.concatenate %25, %33 in 0 : vector<16x32xf32>, vector<16x32xf32> -> vector<32x32xf32>
    %cst_23 = arith.constant dense<0.000000e+00> : vector<32x32xf32>
    %35 = tpu.matmul %34, %2, %cst_23 {dimension_numbers = #tpu.dot_dimension_numbers<[1], [0], [0], [1], [0, 0, 1, 1], [], []>} : vector<32x32xf32>, vector<32x32xf32>, vector<32x32xf32> -> vector<32x32xf32>
    %36 = vector.broadcast %3 : vector<1x32xf32> to vector<32x32xf32>
    %37 = arith.addf %35, %36 : vector<32x32xf32>
    %cst_24 = arith.constant 9.99999997E-7 : f32
    %38 = vector.broadcast %cst_24 : f32 to vector<32x32xf32>
    %39 = arith.cmpf ogt, %37, %38 : vector<32x32xf32>
    %cst_25 = arith.constant 0.000000e+00 : f32
    %40 = vector.broadcast %cst_25 : f32 to vector<32x32xf32>
    %41 = arith.select %39, %37, %40 : vector<32x32xi1>, vector<32x32xf32>
    %cst_26 = arith.constant dense<0.000000e+00> : vector<32x128xf32>
    %42 = tpu.matmul %41, %4, %cst_26 {dimension_numbers = #tpu.dot_dimension_numbers<[1], [0], [0], [1], [0, 0, 1, 1], [], []>} : vector<32x32xf32>, vector<32x128xf32>, vector<32x128xf32> -> vector<32x128xf32>
    %43 = vector.broadcast %5 : vector<1x128xf32> to vector<32x128xf32>
    %44 = arith.addf %42, %43 : vector<32x128xf32>
    %45 = vector.extract_strided_slice %44 {offsets = [0, 0], sizes = [8, 128], strides = [1, 1]} : vector<32x128xf32> to vector<8x128xf32>
    %46 = vector.shape_cast %45 : vector<8x128xf32> to vector<8x1x128xf32>
    %c0_27 = arith.constant 0 : index
    %c0_28 = arith.constant 0 : index
    %c0_29 = arith.constant 0 : index
    %47 = vector.load %arg9[%c0_27, %c0_28, %c0_29] : memref<8x8x128xf32, #tpu.memory_space<vmem>>, vector<8x1x128xf32>
    tpu.vector_store %arg9[%c0_27, %c0_28, %c0_29], %46 {strides = array<i32>} : memref<8x8x128xf32, #tpu.memory_space<vmem>>, vector<8x1x128xf32>,
    %48 = vector.extract_strided_slice %44 {offsets = [8, 0], sizes = [8, 128], strides = [1, 1]} : vector<32x128xf32> to vector<8x128xf32>
    %49 = vector.shape_cast %48 : vector<8x128xf32> to vector<8x1x128xf32>
    %c0_30 = arith.constant 0 : index
    %c1 = arith.constant 1 : index
    %c0_31 = arith.constant 0 : index
    %50 = vector.load %arg9[%c0_30, %c1, %c0_31] : memref<8x8x128xf32, #tpu.memory_space<vmem>>, vector<8x1x128xf32>
    tpu.vector_store %arg9[%c0_30, %c1, %c0_31], %49 {strides = array<i32>} : memref<8x8x128xf32, #tpu.memory_space<vmem>>, vector<8x1x128xf32>,
    %51 = vector.extract_strided_slice %44 {offsets = [16, 0], sizes = [8, 128], strides = [1, 1]} : vector<32x128xf32> to vector<8x128xf32>
    %52 = vector.shape_cast %51 : vector<8x128xf32> to vector<8x1x128xf32>
    %c0_32 = arith.constant 0 : index
    %c2 = arith.constant 2 : index
    %c0_33 = arith.constant 0 : index
    %53 = vector.load %arg9[%c0_32, %c2, %c0_33] : memref<8x8x128xf32, #tpu.memory_space<vmem>>, vector<8x1x128xf32>
    tpu.vector_store %arg9[%c0_32, %c2, %c0_33], %52 {strides = array<i32>} : memref<8x8x128xf32, #tpu.memory_space<vmem>>, vector<8x1x128xf32>,
    %54 = vector.extract_strided_slice %44 {offsets = [24, 0], sizes = [8, 128], strides = [1, 1]} : vector<32x128xf32> to vector<8x128xf32>
    %55 = vector.shape_cast %54 : vector<8x128xf32> to vector<8x1x128xf32>
    %c0_34 = arith.constant 0 : index
    %c3 = arith.constant 3 : index
    %c0_35 = arith.constant 0 : index
    %56 = vector.load %arg9[%c0_34, %c3, %c0_35] : memref<8x8x128xf32, #tpu.memory_space<vmem>>, vector<8x1x128xf32>
    tpu.vector_store %arg9[%c0_34, %c3, %c0_35], %55 {strides = array<i32>} : memref<8x8x128xf32, #tpu.memory_space<vmem>>, vector<8x1x128xf32>,
    %cst_36 = arith.constant 0.000000e+00 : f32
    %57 = vector.broadcast %cst_36 : f32 to vector<8x4x128xf32>
    %c0_37 = arith.constant 0 : index
    %c4 = arith.constant 4 : index
    %c0_38 = arith.constant 0 : index
    %58 = vector.load %arg9[%c0_37, %c4, %c0_38] : memref<8x8x128xf32, #tpu.memory_space<vmem>>, vector<8x4x128xf32>
    tpu.vector_store %arg9[%c0_37, %c4, %c0_38], %57 {strides = array<i32>} : memref<8x8x128xf32, #tpu.memory_space<vmem>>, vector<8x4x128xf32>,
    return
  }
  func.func @transform_0(%arg0: i32) -> (i32, i32, i32) {
    %c0_i32 = arith.constant 0 : i32
    %c0_i32_0 = arith.constant 0 : i32
    %c0_i32_1 = arith.constant 0 : i32
    return %c0_i32, %arg0, %c0_i32_0 : i32, i32, i32
  }
  func.func @transform_1(%arg0: i32) -> (i32, i32, i32) {
    %c0_i32 = arith.constant 0 : i32
    %c0_i32_0 = arith.constant 0 : i32
    %c0_i32_1 = arith.constant 0 : i32
    return %c0_i32, %arg0, %c0_i32_0 : i32, i32, i32
  }
  func.func @transform_2(%arg0: i32) -> (i32, i32) {
    %c0_i32 = arith.constant 0 : i32
    %c0_i32_0 = arith.constant 0 : i32
    %c0_i32_1 = arith.constant 0 : i32
    return %c0_i32, %c0_i32_0 : i32, i32
  }
  func.func @transform_3(%arg0: i32) -> (i32, i32) {
    %c0_i32 = arith.constant 0 : i32
    %c0_i32_0 = arith.constant 0 : i32
    %c0_i32_1 = arith.constant 0 : i32
    return %c0_i32, %c0_i32_0 : i32, i32
  }
  func.func @transform_4(%arg0: i32) -> (i32, i32) {
    %c0_i32 = arith.constant 0 : i32
    %c0_i32_0 = arith.constant 0 : i32
    %c0_i32_1 = arith.constant 0 : i32
    return %c0_i32, %c0_i32_0 : i32, i32
  }
  func.func @transform_5(%arg0: i32) -> (i32, i32) {
    %c0_i32 = arith.constant 0 : i32
    %c0_i32_0 = arith.constant 0 : i32
    %c0_i32_1 = arith.constant 0 : i32
    return %c0_i32, %c0_i32_0 : i32, i32
  }
  func.func @transform_6(%arg0: i32) -> (i32, i32) {
    %c0_i32 = arith.constant 0 : i32
    %c0_i32_0 = arith.constant 0 : i32
    %c0_i32_1 = arith.constant 0 : i32
    return %c0_i32, %c0_i32_0 : i32, i32
  }
  func.func @transform_7(%arg0: i32) -> (i32, i32) {
    %c0_i32 = arith.constant 0 : i32
    %c0_i32_0 = arith.constant 0 : i32
    %c0_i32_1 = arith.constant 0 : i32
    return %c0_i32, %c0_i32_0 : i32, i32
  }
  func.func @transform_8(%arg0: i32) -> (i32, i32, i32) {
    %c0_i32 = arith.constant 0 : i32
    %c0_i32_0 = arith.constant 0 : i32
    %c0_i32_1 = arith.constant 0 : i32
    return %arg0, %c0_i32, %c0_i32_0 : i32, i32, i32
  }
}

module attributes {stable_mosaic.version = 11 : i64} {
  func.func @_embed_proj_kernel(%arg0: i32, %arg1: memref<2x8x32xf32, #tpu.memory_space<vmem>>, %arg2: memref<2x8x32xf32, #tpu.memory_space<vmem>>, %arg3: memref<32x32xf32, #tpu.memory_space<vmem>>, %arg4: memref<1x32xf32, #tpu.memory_space<vmem>>, %arg5: memref<32x32xf32, #tpu.memory_space<vmem>>, %arg6: memref<1x32xf32, #tpu.memory_space<vmem>>, %arg7: memref<32x128xf32, #tpu.memory_space<vmem>>, %arg8: memref<1x128xf32, #tpu.memory_space<vmem>>, %arg9: memref<8x8x128xf32, #tpu.memory_space<vmem>>) attributes {dimension_semantics = [#tpu.dimension_semantics<parallel>], iteration_bounds = array<i64: 1>, scalar_prefetch = 0 : i64, scratch_operands = 0 : i64, tpu.core_type = #tpu.core_type<tc>, window_params = [{transform_indices = @transform_0, window_bounds = array<i64: 2, 8, 32>}, {transform_indices = @transform_1, window_bounds = array<i64: 2, 8, 32>}, {pipeline_mode = #tpu.pipeline_mode<synchronous>, transform_indices = @transform_2, window_bounds = array<i64: 32, 32>}, {pipeline_mode = #tpu.pipeline_mode<synchronous>, transform_indices = @transform_3, window_bounds = array<i64: 1, 32>}, {pipeline_mode = #tpu.pipeline_mode<synchronous>, transform_indices = @transform_4, window_bounds = array<i64: 32, 32>}, {pipeline_mode = #tpu.pipeline_mode<synchronous>, transform_indices = @transform_5, window_bounds = array<i64: 1, 32>}, {pipeline_mode = #tpu.pipeline_mode<synchronous>, transform_indices = @transform_6, window_bounds = array<i64: 32, 128>}, {pipeline_mode = #tpu.pipeline_mode<synchronous>, transform_indices = @transform_7, window_bounds = array<i64: 1, 128>}, {transform_indices = @transform_8, window_bounds = array<i64: 8, 8, 128>}]} {
    %c0 = arith.constant 0 : index
    %c0_0 = arith.constant 0 : index
    %0 = vector.load %arg3[%c0, %c0_0] : memref<32x32xf32, #tpu.memory_space<vmem>>, vector<32x32xf32>
    %c0_1 = arith.constant 0 : index
    %c0_2 = arith.constant 0 : index
    %1 = vector.load %arg4[%c0_1, %c0_2] : memref<1x32xf32, #tpu.memory_space<vmem>>, vector<1x32xf32>
    %c0_3 = arith.constant 0 : index
    %c0_4 = arith.constant 0 : index
    %2 = vector.load %arg5[%c0_3, %c0_4] : memref<32x32xf32, #tpu.memory_space<vmem>>, vector<32x32xf32>
    %c0_5 = arith.constant 0 : index
    %c0_6 = arith.constant 0 : index
    %3 = vector.load %arg6[%c0_5, %c0_6] : memref<1x32xf32, #tpu.memory_space<vmem>>, vector<1x32xf32>
    %c0_7 = arith.constant 0 : index
    %c0_8 = arith.constant 0 : index
    %4 = vector.load %arg7[%c0_7, %c0_8] : memref<32x128xf32, #tpu.memory_space<vmem>>, vector<32x128xf32>
    %c0_9 = arith.constant 0 : index
    %c0_10 = arith.constant 0 : index
    %5 = vector.load %arg8[%c0_9, %c0_10] : memref<1x128xf32, #tpu.memory_space<vmem>>, vector<1x128xf32>
    %c0_11 = arith.constant 0 : index
    %c0_12 = arith.constant 0 : index
    %c0_13 = arith.constant 0 : index
    %6 = vector.load %arg1[%c0_11, %c0_12, %c0_13] : memref<2x8x32xf32, #tpu.memory_space<vmem>>, vector<2x8x32xf32>
    %cst = arith.constant dense<0xFF800000> : vector<2x8xf32>
    %7 = vector.multi_reduction <maximumf>, %6, %cst [2] : vector<2x8x32xf32> to vector<2x8xf32>
    %8 = vector.shape_cast %7 : vector<2x8xf32> to vector<2x8x1xf32>
    %9 = vector.broadcast %8 : vector<2x8x1xf32> to vector<2x8x32xf32>
    %10 = arith.subf %6, %9 : vector<2x8x32xf32>
    %11 = math.exp %10 : vector<2x8x32xf32>
    %cst_14 = arith.constant dense<0.000000e+00> : vector<2x8xf32>
    %12 = vector.multi_reduction <add>, %11, %cst_14 [2] : vector<2x8x32xf32> to vector<2x8xf32>
    %13 = vector.shape_cast %12 : vector<2x8xf32> to vector<2x8x1xf32>
    %14 = tpu.reciprocal %13 : vector<2x8x1xf32> -> vector<2x8x1xf32>
    %15 = vector.shape_cast %11 : vector<2x8x32xf32> to vector<16x32xf32>
    %cst_15 = arith.constant dense<0.000000e+00> : vector<16x32xf32>
    %16 = tpu.matmul %15, %0, %cst_15 {dimension_numbers = #tpu.dot_dimension_numbers<[1], [0], [0], [1], [0, 0, 1, 1], [], []>} : vector<16x32xf32>, vector<32x32xf32>, vector<16x32xf32> -> vector<16x32xf32>
    %17 = vector.shape_cast %14 : vector<2x8x1xf32> to vector<16x1xf32>
    %18 = vector.broadcast %17 : vector<16x1xf32> to vector<16x32xf32>
    %19 = arith.mulf %16, %18 : vector<16x32xf32>
    %20 = vector.broadcast %1 : vector<1x32xf32> to vector<16x32xf32>
    %21 = arith.addf %19, %20 : vector<16x32xf32>
    %cst_16 = arith.constant 9.99999997E-7 : f32
    %22 = vector.broadcast %cst_16 : f32 to vector<16x32xf32>
    %23 = arith.cmpf ogt, %21, %22 : vector<16x32xf32>
    %cst_17 = arith.constant 0.000000e+00 : f32
    %24 = vector.broadcast %cst_17 : f32 to vector<16x32xf32>
    %25 = arith.select %23, %21, %24 : vector<16x32xi1>, vector<16x32xf32>
    %c0_18 = arith.constant 0 : index
    %c0_19 = arith.constant 0 : index
    %c0_20 = arith.constant 0 : index
    %26 = vector.load %arg2[%c0_18, %c0_19, %c0_20] : memref<2x8x32xf32, #tpu.memory_space<vmem>>, vector<2x8x32xf32>
    %27 = vector.shape_cast %26 : vector<2x8x32xf32> to vector<16x32xf32>
    %28 = vector.broadcast %1 : vector<1x32xf32> to vector<16x32xf32>
    %29 = arith.addf %27, %28 : vector<16x32xf32>
    %cst_21 = arith.constant 9.99999997E-7 : f32
    %30 = vector.broadcast %cst_21 : f32 to vector<16x32xf32>
    %31 = arith.cmpf ogt, %29, %30 : vector<16x32xf32>
    %cst_22 = arith.constant 0.000000e+00 : f32
    %32 = vector.broadcast %cst_22 : f32 to vector<16x32xf32>
    %33 = arith.select %31, %29, %32 : vector<16x32xi1>, vector<16x32xf32>
    %34 = tpu.concatenate %25, %33 in 0 : vector<16x32xf32>, vector<16x32xf32> -> vector<32x32xf32>
    %cst_23 = arith.constant dense<0.000000e+00> : vector<32x32xf32>
    %35 = tpu.matmul %34, %2, %cst_23 {dimension_numbers = #tpu.dot_dimension_numbers<[1], [0], [0], [1], [0, 0, 1, 1], [], []>} : vector<32x32xf32>, vector<32x32xf32>, vector<32x32xf32> -> vector<32x32xf32>
    %36 = vector.broadcast %3 : vector<1x32xf32> to vector<32x32xf32>
    %37 = arith.addf %35, %36 : vector<32x32xf32>
    %cst_24 = arith.constant 9.99999997E-7 : f32
    %38 = vector.broadcast %cst_24 : f32 to vector<32x32xf32>
    %39 = arith.cmpf ogt, %37, %38 : vector<32x32xf32>
    %cst_25 = arith.constant 0.000000e+00 : f32
    %40 = vector.broadcast %cst_25 : f32 to vector<32x32xf32>
    %41 = arith.select %39, %37, %40 : vector<32x32xi1>, vector<32x32xf32>
    %cst_26 = arith.constant dense<0.000000e+00> : vector<32x128xf32>
    %42 = tpu.matmul %41, %4, %cst_26 {dimension_numbers = #tpu.dot_dimension_numbers<[1], [0], [0], [1], [0, 0, 1, 1], [], []>} : vector<32x32xf32>, vector<32x128xf32>, vector<32x128xf32> -> vector<32x128xf32>
    %43 = vector.broadcast %5 : vector<1x128xf32> to vector<32x128xf32>
    %44 = arith.addf %42, %43 : vector<32x128xf32>
    %45 = vector.extract_strided_slice %44 {offsets = [0, 0], sizes = [8, 128], strides = [1, 1]} : vector<32x128xf32> to vector<8x128xf32>
    %46 = vector.shape_cast %45 : vector<8x128xf32> to vector<8x1x128xf32>
    %c0_27 = arith.constant 0 : index
    %c0_28 = arith.constant 0 : index
    %c0_29 = arith.constant 0 : index
    %47 = vector.load %arg9[%c0_27, %c0_28, %c0_29] : memref<8x8x128xf32, #tpu.memory_space<vmem>>, vector<8x1x128xf32>
    tpu.vector_store %arg9[%c0_27, %c0_28, %c0_29], %46 {strides = array<i32>} : memref<8x8x128xf32, #tpu.memory_space<vmem>>, vector<8x1x128xf32>,
    %48 = vector.extract_strided_slice %44 {offsets = [8, 0], sizes = [8, 128], strides = [1, 1]} : vector<32x128xf32> to vector<8x128xf32>
    %49 = vector.shape_cast %48 : vector<8x128xf32> to vector<8x1x128xf32>
    %c0_30 = arith.constant 0 : index
    %c1 = arith.constant 1 : index
    %c0_31 = arith.constant 0 : index
    %50 = vector.load %arg9[%c0_30, %c1, %c0_31] : memref<8x8x128xf32, #tpu.memory_space<vmem>>, vector<8x1x128xf32>
    tpu.vector_store %arg9[%c0_30, %c1, %c0_31], %49 {strides = array<i32>} : memref<8x8x128xf32, #tpu.memory_space<vmem>>, vector<8x1x128xf32>,
    %51 = vector.extract_strided_slice %44 {offsets = [16, 0], sizes = [8, 128], strides = [1, 1]} : vector<32x128xf32> to vector<8x128xf32>
    %52 = vector.shape_cast %51 : vector<8x128xf32> to vector<8x1x128xf32>
    %c0_32 = arith.constant 0 : index
    %c2 = arith.constant 2 : index
    %c0_33 = arith.constant 0 : index
    %53 = vector.load %arg9[%c0_32, %c2, %c0_33] : memref<8x8x128xf32, #tpu.memory_space<vmem>>, vector<8x1x128xf32>
    tpu.vector_store %arg9[%c0_32, %c2, %c0_33], %52 {strides = array<i32>} : memref<8x8x128xf32, #tpu.memory_space<vmem>>, vector<8x1x128xf32>,
    %54 = vector.extract_strided_slice %44 {offsets = [24, 0], sizes = [8, 128], strides = [1, 1]} : vector<32x128xf32> to vector<8x128xf32>
    %55 = vector.shape_cast %54 : vector<8x128xf32> to vector<8x1x128xf32>
    %c0_34 = arith.constant 0 : index
    %c3 = arith.constant 3 : index
    %c0_35 = arith.constant 0 : index
    %56 = vector.load %arg9[%c0_34, %c3, %c0_35] : memref<8x8x128xf32, #tpu.memory_space<vmem>>, vector<8x1x128xf32>
    tpu.vector_store %arg9[%c0_34, %c3, %c0_35], %55 {strides = array<i32>} : memref<8x8x128xf32, #tpu.memory_space<vmem>>, vector<8x1x128xf32>,
    %cst_36 = arith.constant 0.000000e+00 : f32
    %57 = vector.broadcast %cst_36 : f32 to vector<8x4x128xf32>
    %c0_37 = arith.constant 0 : index
    %c4 = arith.constant 4 : index
    %c0_38 = arith.constant 0 : index
    %58 = vector.load %arg9[%c0_37, %c4, %c0_38] : memref<8x8x128xf32, #tpu.memory_space<vmem>>, vector<8x4x128xf32>
    tpu.vector_store %arg9[%c0_37, %c4, %c0_38], %57 {strides = array<i32>} : memref<8x8x128xf32, #tpu.memory_space<vmem>>, vector<8x4x128xf32>,
    return
  }
  func.func @transform_0(%arg0: i32) -> (i32, i32, i32) {
    %c0_i32 = arith.constant 0 : i32
    %c0_i32_0 = arith.constant 0 : i32
    %c0_i32_1 = arith.constant 0 : i32
    return %c0_i32, %arg0, %c0_i32_0 : i32, i32, i32
  }
  func.func @transform_1(%arg0: i32) -> (i32, i32, i32) {
    %c0_i32 = arith.constant 0 : i32
    %c0_i32_0 = arith.constant 0 : i32
    %c0_i32_1 = arith.constant 0 : i32
    return %c0_i32, %arg0, %c0_i32_0 : i32, i32, i32
  }
  func.func @transform_2(%arg0: i32) -> (i32, i32) {
    %c0_i32 = arith.constant 0 : i32
    %c0_i32_0 = arith.constant 0 : i32
    %c0_i32_1 = arith.constant 0 : i32
    return %c0_i32, %c0_i32_0 : i32, i32
  }
  func.func @transform_3(%arg0: i32) -> (i32, i32) {
    %c0_i32 = arith.constant 0 : i32
    %c0_i32_0 = arith.constant 0 : i32
    %c0_i32_1 = arith.constant 0 : i32
    return %c0_i32, %c0_i32_0 : i32, i32
  }
  func.func @transform_4(%arg0: i32) -> (i32, i32) {
    %c0_i32 = arith.constant 0 : i32
    %c0_i32_0 = arith.constant 0 : i32
    %c0_i32_1 = arith.constant 0 : i32
    return %c0_i32, %c0_i32_0 : i32, i32
  }
  func.func @transform_5(%arg0: i32) -> (i32, i32) {
    %c0_i32 = arith.constant 0 : i32
    %c0_i32_0 = arith.constant 0 : i32
    %c0_i32_1 = arith.constant 0 : i32
    return %c0_i32, %c0_i32_0 : i32, i32
  }
  func.func @transform_6(%arg0: i32) -> (i32, i32) {
    %c0_i32 = arith.constant 0 : i32
    %c0_i32_0 = arith.constant 0 : i32
    %c0_i32_1 = arith.constant 0 : i32
    return %c0_i32, %c0_i32_0 : i32, i32
  }
  func.func @transform_7(%arg0: i32) -> (i32, i32) {
    %c0_i32 = arith.constant 0 : i32
    %c0_i32_0 = arith.constant 0 : i32
    %c0_i32_1 = arith.constant 0 : i32
    return %c0_i32, %c0_i32_0 : i32, i32
  }
  func.func @transform_8(%arg0: i32) -> (i32, i32, i32) {
    %c0_i32 = arith.constant 0 : i32
    %c0_i32_0 = arith.constant 0 : i32
    %c0_i32_1 = arith.constant 0 : i32
    return %arg0, %c0_i32, %c0_i32_0 : i32, i32, i32
  }
}

</mosaic_0001>

<llo_original>
// kernel: tpu_custom_call.1
$region0: #{tpu_custom_call.1}
  #allocation0 [shape = 'u32[]', space=smem, size = 0x4, offset = 0x4, fixed_abs, tag = 'smem constant byte address 0x4 - core index']
  #allocation1 [shape = 'u32[72,128]{1,0:T(1,128)}', space=vmem, size = 0x9000, scoped, tag = 'internal scratch']
  %s0 = inlined_call_operand.hbm [shape: f32[2,8,32], index: 0, kind: input, shape index: {}]
  %s1 = inlined_call_operand.hbm [shape: f32[2,8,32], index: 1, kind: input, shape index: {}]
  %s2 = inlined_call_operand.hbm [shape: f32[32,32], index: 2, kind: input, shape index: {}]
  %s3 = inlined_call_operand.vmem [shape: f32[1,32], index: 3, kind: input, shape index: {}]
  %s4 = inlined_call_operand.hbm [shape: f32[32,32], index: 4, kind: input, shape index: {}]
  %s5 = inlined_call_operand.vmem [shape: f32[1,32], index: 5, kind: input, shape index: {}]
  %s6 = inlined_call_operand.hbm [shape: f32[32,128], index: 6, kind: input, shape index: {}]
  %s7 = inlined_call_operand.vmem [shape: f32[1,128], index: 7, kind: input, shape index: {}]
  %s8 = inlined_call_operand.hbm [shape: f32[8,8,128], index: 8, kind: output, shape index: {}]
  %s9 = sld [smem:[#allocation0]]
  $region62: #{tpu_custom_call.1} parent=0
    _
  %s11 = ssub.s32 1, %s9
  %s12 = scalar_select 0, %s11, %s9
  $region1: #{tpu_custom_call.1} parent=0
    #allocation2 [shape = 'u8[8192]{0}', space=vmem, size = 0x2000, scoped, tag = 'input window, operand 0, single buffered']
    #allocation3 [shape = 's32[1]{0}', space=sflag, size = 0x4, scoped, tag = 'scoped memory for tpu_custom_call.1']
    #allocation4 [shape = 's32[1]{0}', space=sflag, size = 0x4, scoped, tag = 'scoped memory for tpu_custom_call.1']
    #allocation5 [shape = 'u8[8192]{0}', space=vmem, size = 0x2000, scoped, tag = 'input window, operand 1, single buffered']
    #allocation6 [shape = 's32[1]{0}', space=sflag, size = 0x4, scoped, tag = 'scoped memory for tpu_custom_call.1']
    #allocation7 [shape = 'u8[16384]{0}', space=vmem, size = 0x4000, scoped, tag = 'input window, operand 2, single buffered']
    #allocation8 [shape = 'u8[16384]{0}', space=vmem, size = 0x4000, scoped, tag = 'input window, operand 4, single buffered']
    #allocation9 [shape = 's32[1]{0}', space=sflag, size = 0x4, scoped, tag = 'scoped memory for tpu_custom_call.1']
    #allocation10 [shape = 'u8[16384]{0}', space=vmem, size = 0x4000, scoped, tag = 'input window, operand 6, single buffered']
    #allocation11 [shape = 'u8[32768]{0}', space=vmem, size = 0x8000, scoped, tag = 'output window, operand 0, single buffered']
    %13 = vsyncpa [#allocation3], 0
    %14 = vsyncpa [#allocation6], 0
    %15 = vsyncpa [#allocation9], 0
    %16 = vsyncpa [#allocation4], 0
    // Predicated region
    $region2: #{tpu_custom_call.1} parent=1 // pred_check
      _
    $region3: #{tpu_custom_call.1} parent=1 // pred_check_branch
      %18 = sbr.rel (0) target = $region5
    $region4: #{tpu_custom_call.1} parent=1 // pred_region
      %20 = vsyncadd [#allocation3], 0
      %s21 = sshll.u32 %s0, 4
      %s22 = int_to_ptr.hbm [resolvable:$true] %s21
      %s23 = sshll.u32 [#allocation2], 4
      %s24 = int_to_ptr.vmem [resolvable:$true] %s23
      %29 = dma.hbm_to_vmem [thread:$0]  %s22, 256, %s24, [#allocation3], 128, 128, 8
    $region5: #{tpu_custom_call.1} parent=1 // pred_fallthru
      _
    // Predicated region
    $region6: #{tpu_custom_call.1} parent=1 // pred_check
      _
    $region7: #{tpu_custom_call.1} parent=1 // pred_check_branch
      %31 = sbr.rel (0) target = $region9
    $region8: #{tpu_custom_call.1} parent=1 // pred_region
      %33 = vsyncadd [#allocation6], 0
      %s34 = sshll.u32 %s1, 4
      %s35 = int_to_ptr.hbm [resolvable:$true] %s34
      %s36 = sshll.u32 [#allocation5], 4
      %s37 = int_to_ptr.vmem [resolvable:$true] %s36
      %42 = dma.hbm_to_vmem [thread:$0]  %s35, 256, %s37, [#allocation6], 128, 128, 8
    $region9: #{tpu_custom_call.1} parent=1 // pred_fallthru
      _
    // Predicated region
    $region10: #{tpu_custom_call.1} parent=1 // pred_check
      _
    $region11: #{tpu_custom_call.1} parent=1 // pred_check_branch
      %44 = sbr.rel (0) target = $region13
    $region12: #{tpu_custom_call.1} parent=1 // pred_region
      %46 = vsyncadd [#allocation6], 0
      %s47 = sshll.u32 %s2, 4
      %s48 = int_to_ptr.hbm [resolvable:$true] %s47
      %s49 = sshll.u32 [#allocation7], 4
      %s50 = int_to_ptr.vmem [resolvable:$true] %s49
      %55 = dma.hbm_to_vmem [thread:$0]  %s48, 512, %s50, [#allocation6], 128, 128, 8
    $region13: #{tpu_custom_call.1} parent=1 // pred_fallthru
      _
    // Predicated region
    $region14: #{tpu_custom_call.1} parent=1 // pred_check
      _
    $region15: #{tpu_custom_call.1} parent=1 // pred_check_branch
      %57 = sbr.rel (0) target = $region17
    $region16: #{tpu_custom_call.1} parent=1 // pred_region
      _
    $region17: #{tpu_custom_call.1} parent=1 // pred_fallthru
      _
    // Predicated region
    $region18: #{tpu_custom_call.1} parent=1 // pred_check
      _
    $region19: #{tpu_custom_call.1} parent=1 // pred_check_branch
      %59 = sbr.rel (0) target = $region21
    $region20: #{tpu_custom_call.1} parent=1 // pred_region
      %61 = vsyncadd [#allocation9], 0
      %s62 = sshll.u32 %s4, 4
      %s63 = int_to_ptr.hbm [resolvable:$true] %s62
      %s64 = sshll.u32 [#allocation8], 4
      %s65 = int_to_ptr.vmem [resolvable:$true] %s64
      %70 = dma.hbm_to_vmem [thread:$0]  %s63, 512, %s65, [#allocation9], 128, 128, 8
    $region21: #{tpu_custom_call.1} parent=1 // pred_fallthru
      _
    // Predicated region
    $region22: #{tpu_custom_call.1} parent=1 // pred_check
      _
    $region23: #{tpu_custom_call.1} parent=1 // pred_check_branch
      %72 = sbr.rel (0) target = $region25
    $region24: #{tpu_custom_call.1} parent=1 // pred_region
      _
    $region25: #{tpu_custom_call.1} parent=1 // pred_fallthru
      _
    // Predicated region
    $region26: #{tpu_custom_call.1} parent=1 // pred_check
      _
    $region27: #{tpu_custom_call.1} parent=1 // pred_check_branch
      %74 = sbr.rel (0) target = $region29
    $region28: #{tpu_custom_call.1} parent=1 // pred_region
      %76 = vsyncadd [#allocation9], 0
      %s77 = sshll.u32 %s6, 4
      %s78 = int_to_ptr.hbm [resolvable:$true] %s77
      %s79 = sshll.u32 [#allocation10], 4
      %s80 = int_to_ptr.vmem [resolvable:$true] %s79
      %85 = dma.hbm_to_vmem [thread:$0]  %s78, 512, %s80, [#allocation9], 128, 128, 8
    $region29: #{tpu_custom_call.1} parent=1 // pred_fallthru
      _
    // Predicated region
    $region30: #{tpu_custom_call.1} parent=1 // pred_check
      _
    $region31: #{tpu_custom_call.1} parent=1 // pred_check_branch
      %87 = sbr.rel (0) target = $region33
    $region32: #{tpu_custom_call.1} parent=1 // pred_region
      _
    $region33: #{tpu_custom_call.1} parent=1 // pred_fallthru
      _
    // Predicated region
    $region34: #{tpu_custom_call.1} parent=1 // pred_check
      _
    $region35: #{tpu_custom_call.1} parent=1 // pred_check_branch
      %89 = sbr.rel (0) target = $region37
    $region36: #{tpu_custom_call.1} parent=1 // pred_region
      %91 = dma.done [#allocation3], 256
    $region37: #{tpu_custom_call.1} parent=1 // pred_fallthru
      _
    // Predicated region
    $region38: #{tpu_custom_call.1} parent=1 // pred_check
      _
    $region39: #{tpu_custom_call.1} parent=1 // pred_check_branch
      %93 = sbr.rel (0) target = $region41
    $region40: #{tpu_custom_call.1} parent=1 // pred_region
      %95 = dma.done [#allocation6], 256
    $region41: #{tpu_custom_call.1} parent=1 // pred_fallthru
      _
    // Predicated region
    $region42: #{tpu_custom_call.1} parent=1 // pred_check
      _
    $region43: #{tpu_custom_call.1} parent=1 // pred_check_branch
      %97 = sbr.rel (0) target = $region45
    $region44: #{tpu_custom_call.1} parent=1 // pred_region
      %99 = dma.done [#allocation6], 512
    $region45: #{tpu_custom_call.1} parent=1 // pred_fallthru
      _
    // Predicated region
    $region46: #{tpu_custom_call.1} parent=1 // pred_check
      _
    $region47: #{tpu_custom_call.1} parent=1 // pred_check_branch
      %101 = sbr.rel (0) target = $region49
    $region48: #{tpu_custom_call.1} parent=1 // pred_region
      %103 = dma.done [#allocation9], 512
    $region49: #{tpu_custom_call.1} parent=1 // pred_fallthru
      _
    // Predicated region
    $region50: #{tpu_custom_call.1} parent=1 // pred_check
      _
    $region51: #{tpu_custom_call.1} parent=1 // pred_check_branch
      %105 = sbr.rel (0) target = $region53
    $region52: #{tpu_custom_call.1} parent=1 // pred_region
      %107 = dma.done [#allocation9], 512
    $region53: #{tpu_custom_call.1} parent=1 // pred_fallthru
      _
    %v108 = vld [vmem:[#allocation7] sm:$0xff]
    %v109 = vld [vmem:[#allocation7 + $0x8] sm:$0xff]
    %v110 = vld [vmem:[#allocation7 + $0x10] sm:$0xff]
    %v111 = vld [vmem:[#allocation7 + $0x18] sm:$0xff]
    %v112 = vld [vmem:[%s3] sm:$0x1]
    %v113 = vld [vmem:[#allocation8] sm:$0xff]
    %v114 = vld [vmem:[#allocation8 + $0x8] sm:$0xff]
    %v115 = vld [vmem:[#allocation8 + $0x10] sm:$0xff]
    %v116 = vld [vmem:[#allocation8 + $0x18] sm:$0xff]
    %v117 = vld [vmem:[%s5] sm:$0x1]
    %v118 = vld [vmem:[#allocation10] sm:$0xff]
    %v119 = vld [vmem:[#allocation10 + $0x8] sm:$0xff]
    %v120 = vld [vmem:[#allocation10 + $0x10] sm:$0xff]
    %v121 = vld [vmem:[#allocation10 + $0x18] sm:$0xff]
    %v122 = vld [vmem:[%s7] sm:$0x1]
    %v123 = vld [vmem:[#allocation2] sm:$0xff]
    %v124 = vld [vmem:[#allocation2 + $0x8] sm:$0xff]
    %vm125 = vcmask 261120
    %v126 = vsel %vm125, %v123, -inf
    %127 = vmax.xlane.f32.xlu0 %v126
    %v128 = vpop.xlane.xlu0 %127
    %v129 = vsel %vm125, %v124, -inf
    %130 = vmax.xlane.f32.xlu0 %v129
    %v131 = vpop.xlane.xlu0 %130
    %v132 = vsub.f32 %v123, %v128
    %v133 = vsub.f32 %v124, %v131
    %v134 = vmul.f32 %v132, 1.442695
    %v135 = vpow.pop %v134
    %v136 = vmul.f32 %v133, 1.442695
    %v137 = vpow.pop %v136
    %v138 = vsel %vm125, %v135, 0.0
    %139 = vadd.xlane.f32.xlu0 %v138
    %v140 = vpop.xlane.xlu0 %139
    %v141 = vsel %vm125, %v137, 0.0
    %142 = vadd.xlane.f32.xlu0 %v141
    %v143 = vpop.xlane.xlu0 %142
    %v144 = vrcp.pop %v140
    %v145 = vmul.f32 %v140, %v144
    %v146 = vsub.f32 1.0, %v145
    %v147 = vmul.f32 %v144, %v146
    %v148 = vadd.f32 %v144, %v147
    %vm149 = vweird.f32 %v140
    %vm150 = vweird.f32 %v144
    %vm151 = vmor %vm149, %vm150
    %v152 = vsel %vm151, %v144, %v148
    %v153 = vand.u32 2147483647, %v140
    %vm154 = vcmp.eq.f32.partialorder %v153, 8.507059e+37
    %v155 = vand.u32 %v140, 2147483648
    %v156 = vor.u32 1.1754944e-38, %v155
    %v157 = vsel %vm154, %v156, %v152
    %v158 = vrcp.pop %v143
    %v159 = vmul.f32 %v143, %v158
    %v160 = vsub.f32 1.0, %v159
    %v161 = vmul.f32 %v158, %v160
    %v162 = vadd.f32 %v158, %v161
    %vm163 = vweird.f32 %v143
    %vm164 = vweird.f32 %v158
    %vm165 = vmor %vm163, %vm164
    %v166 = vsel %vm165, %v158, %v162
    %v167 = vand.u32 2147483647, %v143
    %vm168 = vcmp.eq.f32.partialorder %v167, 8.507059e+37
    %v169 = vand.u32 %v143, 2147483648
    %v170 = vor.u32 1.1754944e-38, %v169
    %v171 = vsel %vm168, %v170, %v166
    %v173 = vsel %vm125, %v135, 0
    %v176 = vsel %vm125, %v137, 0
    %178 = vmatpush.msra.mxu0 0.0
    %179 = vmatpush.msra.mxu0 0.0
    %180 = vmatpush.msra.mxu0 0.0
    %181 = vmatpush.msra.mxu0 0.0
    %182 = vmatpush.msra.mxu0 0.0
    %183 = vmatpush.msra.mxu0 0.0
    %184 = vmatpush.msra.mxu0 0.0
    %185 = vmatpush.msra.mxu0 0.0
    %186 = vmatpush.msra.mxu0 0.0
    %187 = vmatpush.msra.mxu0 0.0
    %188 = vmatpush.msra.mxu0 0.0
    %189 = vmatpush.msra.mxu0 0.0
    %190 = vmatpush.msra.mxu0 %v111
    %191 = vmatpush.msra.mxu0 %v110
    %192 = vmatpush.msra.mxu0 %v109
    %193 = vmatpush.msra.mxu0 %v108
    %194 = vmatmul.f32.gmra.mxu0 %v173
    %v195 = vpop.f32.mrf.mxu0
    %v196 = vadd.f32 0.0, %v195
    %197 = vmatmul.f32.gmra.mxu0 %v176
    %v198 = vpop.f32.mrf.mxu0
    %v199 = vadd.f32 0.0, %v198
    %200 = vdwg.mxu0
    %v201 = vmul.f32 %v196, %v157
    %v202 = vmul.f32 %v199, %v171
    %v204 = vperm.slane %v112, 0
    %v206 = vadd.f32 %v201, %v204
    %v207 = vadd.f32 %v202, %v204
    %vm208 = vcmp.gt.f32.partialorder %v206, 1e-06
    %vm209 = vcmp.gt.f32.partialorder %v207, 1e-06
    %v210 = vsel %vm208, %v206, 0.0
    %v211 = vsel %vm209, %v207, 0.0
    %v212 = vld [vmem:[#allocation5] sm:$0xff]
    %v213 = vld [vmem:[#allocation5 + $0x8] sm:$0xff]
    %v214 = vadd.f32 %v212, %v204
    %v215 = vadd.f32 %v213, %v204
    %vm216 = vcmp.gt.f32.partialorder %v214, 1e-06
    %vm217 = vcmp.gt.f32.partialorder %v215, 1e-06
    %v218 = vsel %vm216, %v214, 0.0
    %v219 = vsel %vm217, %v215, 0.0
    %v221 = vperm.slane %v117, 0
    %v224 = vsel %vm125, %v210, 0
    %v227 = vsel %vm125, %v211, 0
    %v230 = vsel %vm125, %v218, 0
    %v233 = vsel %vm125, %v219, 0
    %235 = vmatpush.msra.mxu0 0.0
    %236 = vmatpush.msra.mxu0 0.0
    %237 = vmatpush.msra.mxu0 0.0
    %238 = vmatpush.msra.mxu0 0.0
    %239 = vmatpush.msra.mxu0 0.0
    %240 = vmatpush.msra.mxu0 0.0
    %241 = vmatpush.msra.mxu0 0.0
    %242 = vmatpush.msra.mxu0 0.0
    %243 = vmatpush.msra.mxu0 0.0
    %244 = vmatpush.msra.mxu0 0.0
    %245 = vmatpush.msra.mxu0 0.0
    %246 = vmatpush.msra.mxu0 0.0
    %247 = vmatpush.msra.mxu0 %v116
    %248 = vmatpush.msra.mxu0 %v115
    %249 = vmatpush.msra.mxu0 %v114
    %250 = vmatpush.msra.mxu0 %v113
    %251 = vmatmul.f32.gmra.mxu0 %v224
    %v252 = vpop.f32.mrf.mxu0
    %v253 = vadd.f32 %v221, %v252
    %254 = vmatmul.f32.gmra.mxu0 %v227
    %v255 = vpop.f32.mrf.mxu0
    %v256 = vadd.f32 %v221, %v255
    %257 = vmatmul.f32.gmra.mxu0 %v230
    %v258 = vpop.f32.mrf.mxu0
    %v259 = vadd.f32 %v221, %v258
    %260 = vmatmul.f32.gmra.mxu0 %v233
    %v261 = vpop.f32.mrf.mxu0
    %v262 = vadd.f32 %v221, %v261
    %263 = vdwg.mxu0
    %vm264 = vcmp.gt.f32.partialorder %v253, 1e-06
    %vm265 = vcmp.gt.f32.partialorder %v256, 1e-06
    %vm266 = vcmp.gt.f32.partialorder %v259, 1e-06
    %vm267 = vcmp.gt.f32.partialorder %v262, 1e-06
    %v268 = vsel %vm264, %v253, 0.0
    %v269 = vsel %vm265, %v256, 0.0
    %v270 = vsel %vm266, %v259, 0.0
    %v271 = vsel %vm267, %v262, 0.0
    %v273 = vperm.slane %v122, 0
    %v276 = vsel %vm125, %v268, 0
    %v279 = vsel %vm125, %v269, 0
    %v282 = vsel %vm125, %v270, 0
    %v285 = vsel %vm125, %v271, 0
    %287 = vmatpush.msra.mxu0 0.0
    %288 = vmatpush.msra.mxu0 0.0
    %289 = vmatpush.msra.mxu0 0.0
    %290 = vmatpush.msra.mxu0 0.0
    %291 = vmatpush.msra.mxu0 0.0
    %292 = vmatpush.msra.mxu0 0.0
    %293 = vmatpush.msra.mxu0 0.0
    %294 = vmatpush.msra.mxu0 0.0
    %295 = vmatpush.msra.mxu0 0.0
    %296 = vmatpush.msra.mxu0 0.0
    %297 = vmatpush.msra.mxu0 0.0
    %298 = vmatpush.msra.mxu0 0.0
    %299 = vmatpush.msra.mxu0 %v121
    %300 = vmatpush.msra.mxu0 %v120
    %301 = vmatpush.msra.mxu0 %v119
    %302 = vmatpush.msra.mxu0 %v118
    %303 = vmatmul.f32.gmra.mxu0 %v276
    %v304 = vpop.f32.mrf.mxu0
    %v305 = vadd.f32 %v273, %v304
    %306 = vmatmul.f32.gmra.mxu0 %v279
    %v307 = vpop.f32.mrf.mxu0
    %v308 = vadd.f32 %v273, %v307
    %309 = vmatmul.f32.gmra.mxu0 %v282
    %v310 = vpop.f32.mrf.mxu0
    %v311 = vadd.f32 %v273, %v310
    %312 = vmatmul.f32.gmra.mxu0 %v285
    %v313 = vpop.f32.mrf.mxu0
    %v314 = vadd.f32 %v273, %v313
    %315 = vdwg.mxu0
    %v317 = vrot.slane %v305, 1
    %v318 = vrot.slane %v305, 2
    %v319 = vrot.slane %v305, 3
    %v320 = vrot.slane %v305, 4
    %v321 = vrot.slane %v305, 5
    %v322 = vrot.slane %v305, 6
    %v323 = vrot.slane %v305, 7
    %331 = vst [vmem:[#allocation11] sm:$0x1] %v305
    %332 = vst [vmem:[#allocation11 + $0x8] sm:$0x1] %v317
    %333 = vst [vmem:[#allocation11 + $0x10] sm:$0x1] %v318
    %334 = vst [vmem:[#allocation11 + $0x18] sm:$0x1] %v319
    %335 = vst [vmem:[#allocation11 + $0x20] sm:$0x1] %v320
    %336 = vst [vmem:[#allocation11 + $0x28] sm:$0x1] %v321
    %337 = vst [vmem:[#allocation11 + $0x30] sm:$0x1] %v322
    %338 = vst [vmem:[#allocation11 + $0x38] sm:$0x1] %v323
    %v340 = vrot.slane %v308, 1
    %v341 = vrot.slane %v308, 2
    %v342 = vrot.slane %v308, 3
    %v343 = vrot.slane %v308, 4
    %v344 = vrot.slane %v308, 5
    %v345 = vrot.slane %v308, 6
    %v346 = vrot.slane %v308, 7
    %354 = vst [vmem:[#allocation11 + $0x1] sm:$0x1] %v308
    %355 = vst [vmem:[#allocation11 + $0x9] sm:$0x1] %v340
    %356 = vst [vmem:[#allocation11 + $0x11] sm:$0x1] %v341
    %357 = vst [vmem:[#allocation11 + $0x19] sm:$0x1] %v342
    %358 = vst [vmem:[#allocation11 + $0x21] sm:$0x1] %v343
    %359 = vst [vmem:[#allocation11 + $0x29] sm:$0x1] %v344
    %360 = vst [vmem:[#allocation11 + $0x31] sm:$0x1] %v345
    %361 = vst [vmem:[#allocation11 + $0x39] sm:$0x1] %v346
    %v363 = vrot.slane %v311, 1
    %v364 = vrot.slane %v311, 2
    %v365 = vrot.slane %v311, 3
    %v366 = vrot.slane %v311, 4
    %v367 = vrot.slane %v311, 5
    %v368 = vrot.slane %v311, 6
    %v369 = vrot.slane %v311, 7
    %377 = vst [vmem:[#allocation11 + $0x2] sm:$0x1] %v311
    %378 = vst [vmem:[#allocation11 + $0xa] sm:$0x1] %v363
    %379 = vst [vmem:[#allocation11 + $0x12] sm:$0x1] %v364
    %380 = vst [vmem:[#allocation11 + $0x1a] sm:$0x1] %v365
    %381 = vst [vmem:[#allocation11 + $0x22] sm:$0x1] %v366
    %382 = vst [vmem:[#allocation11 + $0x2a] sm:$0x1] %v367
    %383 = vst [vmem:[#allocation11 + $0x32] sm:$0x1] %v368
    %384 = vst [vmem:[#allocation11 + $0x3a] sm:$0x1] %v369
    %v386 = vrot.slane %v314, 1
    %v387 = vrot.slane %v314, 2
    %v388 = vrot.slane %v314, 3
    %v389 = vrot.slane %v314, 4
    %v390 = vrot.slane %v314, 5
    %v391 = vrot.slane %v314, 6
    %v392 = vrot.slane %v314, 7
    %400 = vst [vmem:[#allocation11 + $0x3] sm:$0x1] %v314
    %401 = vst [vmem:[#allocation11 + $0xb] sm:$0x1] %v386
    %402 = vst [vmem:[#allocation11 + $0x13] sm:$0x1] %v387
    %403 = vst [vmem:[#allocation11 + $0x1b] sm:$0x1] %v388
    %404 = vst [vmem:[#allocation11 + $0x23] sm:$0x1] %v389
    %405 = vst [vmem:[#allocation11 + $0x2b] sm:$0x1] %v390
    %406 = vst [vmem:[#allocation11 + $0x33] sm:$0x1] %v391
    %407 = vst [vmem:[#allocation11 + $0x3b] sm:$0x1] %v392
    %408 = vst [vmem:[#allocation11 + $0x4] sm:$0xf] 0.0
    %409 = vst [vmem:[#allocation11 + $0xc] sm:$0xf] 0.0
    %410 = vst [vmem:[#allocation11 + $0x14] sm:$0xf] 0.0
    %411 = vst [vmem:[#allocation11 + $0x1c] sm:$0xf] 0.0
    %412 = vst [vmem:[#allocation11 + $0x24] sm:$0xf] 0.0
    %413 = vst [vmem:[#allocation11 + $0x2c] sm:$0xf] 0.0
    %414 = vst [vmem:[#allocation11 + $0x34] sm:$0xf] 0.0
    %415 = vst [vmem:[#allocation11 + $0x3c] sm:$0xf] 0.0
    // Predicated region
    $region54: #{tpu_custom_call.1} parent=1 // pred_check
      _
    $region55: #{tpu_custom_call.1} parent=1 // pred_check_branch
      %417 = sbr.rel (0) target = $region57
    $region56: #{tpu_custom_call.1} parent=1 // pred_region
      %419 = vsyncadd [#allocation4], 0
      %s420 = sshll.u32 [#allocation11], 4
      %s421 = int_to_ptr.vmem [resolvable:$true] %s420
      %s422 = sshll.u32 %s8, 4
      %s423 = int_to_ptr.hbm [resolvable:$true] %s422
      %428 = dma.vmem_to_hbm [thread:$0]  %s421, 1024, %s423, [#allocation4], 128, 128, 8
    $region57: #{tpu_custom_call.1} parent=1 // pred_fallthru
      _
    // Predicated region
    $region58: #{tpu_custom_call.1} parent=1 // pred_check
      _
    $region59: #{tpu_custom_call.1} parent=1 // pred_check_branch
      %430 = sbr.rel (0) target = $region61
    $region60: #{tpu_custom_call.1} parent=1 // pred_region
      %432 = dma.done [#allocation4], 1024
    $region61: #{tpu_custom_call.1} parent=1 // pred_fallthru
      _
    %433 = vsyncpa [#allocation3], 1
    %434 = vsyncpa [#allocation6], 1
    %435 = vsyncpa [#allocation9], 1
    %436 = vsyncpa [#allocation4], 1

// kernel: tpu_custom_call.1
$region0: #{tpu_custom_call.1}
  #allocation0 [shape = 'u32[]', space=smem, size = 0x4, offset = 0x4, fixed_abs, tag = 'smem constant byte address 0x4 - core index']
  #allocation1 [shape = 'u32[72,128]{1,0:T(1,128)}', space=vmem, size = 0x9000, scoped, tag = 'internal scratch']
  %s0 = inlined_call_operand.hbm [shape: f32[2,8,32], index: 0, kind: input, shape index: {}]
  %s1 = inlined_call_operand.hbm [shape: f32[2,8,32], index: 1, kind: input, shape index: {}]
  %s2 = inlined_call_operand.hbm [shape: f32[32,32], index: 2, kind: input, shape index: {}]
  %s3 = inlined_call_operand.vmem [shape: f32[1,32], index: 3, kind: input, shape index: {}]
  %s4 = inlined_call_operand.hbm [shape: f32[32,32], index: 4, kind: input, shape index: {}]
  %s5 = inlined_call_operand.vmem [shape: f32[1,32], index: 5, kind: input, shape index: {}]
  %s6 = inlined_call_operand.hbm [shape: f32[32,128], index: 6, kind: input, shape index: {}]
  %s7 = inlined_call_operand.vmem [shape: f32[1,128], index: 7, kind: input, shape index: {}]
  %s8 = inlined_call_operand.hbm [shape: f32[8,8,128], index: 8, kind: output, shape index: {}]
  %s9 = sld [smem:[#allocation0]]
  $region62: #{tpu_custom_call.1} parent=0
    _
  %s11 = ssub.s32 1, %s9
  %s12 = scalar_select 0, %s11, %s9
  $region1: #{tpu_custom_call.1} parent=0
    #allocation2 [shape = 'u8[8192]{0}', space=vmem, size = 0x2000, scoped, tag = 'input window, operand 0, single buffered']
    #allocation3 [shape = 's32[1]{0}', space=sflag, size = 0x4, scoped, tag = 'scoped memory for tpu_custom_call.1']
    #allocation4 [shape = 's32[1]{0}', space=sflag, size = 0x4, scoped, tag = 'scoped memory for tpu_custom_call.1']
    #allocation5 [shape = 'u8[8192]{0}', space=vmem, size = 0x2000, scoped, tag = 'input window, operand 1, single buffered']
    #allocation6 [shape = 's32[1]{0}', space=sflag, size = 0x4, scoped, tag = 'scoped memory for tpu_custom_call.1']
    #allocation7 [shape = 'u8[16384]{0}', space=vmem, size = 0x4000, scoped, tag = 'input window, operand 2, single buffered']
    #allocation8 [shape = 'u8[16384]{0}', space=vmem, size = 0x4000, scoped, tag = 'input window, operand 4, single buffered']
    #allocation9 [shape = 's32[1]{0}', space=sflag, size = 0x4, scoped, tag = 'scoped memory for tpu_custom_call.1']
    #allocation10 [shape = 'u8[16384]{0}', space=vmem, size = 0x4000, scoped, tag = 'input window, operand 6, single buffered']
    #allocation11 [shape = 'u8[32768]{0}', space=vmem, size = 0x8000, scoped, tag = 'output window, operand 0, single buffered']
    %13 = vsyncpa [#allocation3], 0
    %14 = vsyncpa [#allocation6], 0
    %15 = vsyncpa [#allocation9], 0
    %16 = vsyncpa [#allocation4], 0
    // Predicated region
    $region2: #{tpu_custom_call.1} parent=1 // pred_check
      _
    $region3: #{tpu_custom_call.1} parent=1 // pred_check_branch
      %18 = sbr.rel (0) target = $region5
    $region4: #{tpu_custom_call.1} parent=1 // pred_region
      %20 = vsyncadd [#allocation3], 0
      %s21 = sshll.u32 %s0, 4
      %s22 = int_to_ptr.hbm [resolvable:$true] %s21
      %s23 = sshll.u32 [#allocation2], 4
      %s24 = int_to_ptr.vmem [resolvable:$true] %s23
      %29 = dma.hbm_to_vmem [thread:$0]  %s22, 256, %s24, [#allocation3], 128, 128, 8
    $region5: #{tpu_custom_call.1} parent=1 // pred_fallthru
      _
    // Predicated region
    $region6: #{tpu_custom_call.1} parent=1 // pred_check
      _
    $region7: #{tpu_custom_call.1} parent=1 // pred_check_branch
      %31 = sbr.rel (0) target = $region9
    $region8: #{tpu_custom_call.1} parent=1 // pred_region
      %33 = vsyncadd [#allocation6], 0
      %s34 = sshll.u32 %s1, 4
      %s35 = int_to_ptr.hbm [resolvable:$true] %s34
      %s36 = sshll.u32 [#allocation5], 4
      %s37 = int_to_ptr.vmem [resolvable:$true] %s36
      %42 = dma.hbm_to_vmem [thread:$0]  %s35, 256, %s37, [#allocation6], 128, 128, 8
    $region9: #{tpu_custom_call.1} parent=1 // pred_fallthru
      _
    // Predicated region
    $region10: #{tpu_custom_call.1} parent=1 // pred_check
      _
    $region11: #{tpu_custom_call.1} parent=1 // pred_check_branch
      %44 = sbr.rel (0) target = $region13
    $region12: #{tpu_custom_call.1} parent=1 // pred_region
      %46 = vsyncadd [#allocation6], 0
      %s47 = sshll.u32 %s2, 4
      %s48 = int_to_ptr.hbm [resolvable:$true] %s47
      %s49 = sshll.u32 [#allocation7], 4
      %s50 = int_to_ptr.vmem [resolvable:$true] %s49
      %55 = dma.hbm_to_vmem [thread:$0]  %s48, 512, %s50, [#allocation6], 128, 128, 8
    $region13: #{tpu_custom_call.1} parent=1 // pred_fallthru
      _
    // Predicated region
    $region14: #{tpu_custom_call.1} parent=1 // pred_check
      _
    $region15: #{tpu_custom_call.1} parent=1 // pred_check_branch
      %57 = sbr.rel (0) target = $region17
    $region16: #{tpu_custom_call.1} parent=1 // pred_region
      _
    $region17: #{tpu_custom_call.1} parent=1 // pred_fallthru
      _
    // Predicated region
    $region18: #{tpu_custom_call.1} parent=1 // pred_check
      _
    $region19: #{tpu_custom_call.1} parent=1 // pred_check_branch
      %59 = sbr.rel (0) target = $region21
    $region20: #{tpu_custom_call.1} parent=1 // pred_region
      %61 = vsyncadd [#allocation9], 0
      %s62 = sshll.u32 %s4, 4
      %s63 = int_to_ptr.hbm [resolvable:$true] %s62
      %s64 = sshll.u32 [#allocation8], 4
      %s65 = int_to_ptr.vmem [resolvable:$true] %s64
      %70 = dma.hbm_to_vmem [thread:$0]  %s63, 512, %s65, [#allocation9], 128, 128, 8
    $region21: #{tpu_custom_call.1} parent=1 // pred_fallthru
      _
    // Predicated region
    $region22: #{tpu_custom_call.1} parent=1 // pred_check
      _
    $region23: #{tpu_custom_call.1} parent=1 // pred_check_branch
      %72 = sbr.rel (0) target = $region25
    $region24: #{tpu_custom_call.1} parent=1 // pred_region
      _
    $region25: #{tpu_custom_call.1} parent=1 // pred_fallthru
      _
    // Predicated region
    $region26: #{tpu_custom_call.1} parent=1 // pred_check
      _
    $region27: #{tpu_custom_call.1} parent=1 // pred_check_branch
      %74 = sbr.rel (0) target = $region29
    $region28: #{tpu_custom_call.1} parent=1 // pred_region
      %76 = vsyncadd [#allocation9], 0
      %s77 = sshll.u32 %s6, 4
      %s78 = int_to_ptr.hbm [resolvable:$true] %s77
      %s79 = sshll.u32 [#allocation10], 4
      %s80 = int_to_ptr.vmem [resolvable:$true] %s79
      %85 = dma.hbm_to_vmem [thread:$0]  %s78, 512, %s80, [#allocation9], 128, 128, 8
    $region29: #{tpu_custom_call.1} parent=1 // pred_fallthru
      _
    // Predicated region
    $region30: #{tpu_custom_call.1} parent=1 // pred_check
      _
    $region31: #{tpu_custom_call.1} parent=1 // pred_check_branch
      %87 = sbr.rel (0) target = $region33
    $region32: #{tpu_custom_call.1} parent=1 // pred_region
      _
    $region33: #{tpu_custom_call.1} parent=1 // pred_fallthru
      _
    // Predicated region
    $region34: #{tpu_custom_call.1} parent=1 // pred_check
      _
    $region35: #{tpu_custom_call.1} parent=1 // pred_check_branch
      %89 = sbr.rel (0) target = $region37
    $region36: #{tpu_custom_call.1} parent=1 // pred_region
      %91 = dma.done [#allocation3], 256
    $region37: #{tpu_custom_call.1} parent=1 // pred_fallthru
      _
    // Predicated region
    $region38: #{tpu_custom_call.1} parent=1 // pred_check
      _
    $region39: #{tpu_custom_call.1} parent=1 // pred_check_branch
      %93 = sbr.rel (0) target = $region41
    $region40: #{tpu_custom_call.1} parent=1 // pred_region
      %95 = dma.done [#allocation6], 256
    $region41: #{tpu_custom_call.1} parent=1 // pred_fallthru
      _
    // Predicated region
    $region42: #{tpu_custom_call.1} parent=1 // pred_check
      _
    $region43: #{tpu_custom_call.1} parent=1 // pred_check_branch
      %97 = sbr.rel (0) target = $region45
    $region44: #{tpu_custom_call.1} parent=1 // pred_region
      %99 = dma.done [#allocation6], 512
    $region45: #{tpu_custom_call.1} parent=1 // pred_fallthru
      _
    // Predicated region
    $region46: #{tpu_custom_call.1} parent=1 // pred_check
      _
    $region47: #{tpu_custom_call.1} parent=1 // pred_check_branch
      %101 = sbr.rel (0) target = $region49
    $region48: #{tpu_custom_call.1} parent=1 // pred_region
      %103 = dma.done [#allocation9], 512
    $region49: #{tpu_custom_call.1} parent=1 // pred_fallthru
      _
    // Predicated region
    $region50: #{tpu_custom_call.1} parent=1 // pred_check
      _
    $region51: #{tpu_custom_call.1} parent=1 // pred_check_branch
      %105 = sbr.rel (0) target = $region53
    $region52: #{tpu_custom_call.1} parent=1 // pred_region
      %107 = dma.done [#allocation9], 512
    $region53: #{tpu_custom_call.1} parent=1 // pred_fallthru
      _
    %v108 = vld [vmem:[#allocation7] sm:$0xff]
    %v109 = vld [vmem:[#allocation7 + $0x8] sm:$0xff]
    %v110 = vld [vmem:[#allocation7 + $0x10] sm:$0xff]
    %v111 = vld [vmem:[#allocation7 + $0x18] sm:$0xff]
    %v112 = vld [vmem:[%s3] sm:$0x1]
    %v113 = vld [vmem:[#allocation8] sm:$0xff]
    %v114 = vld [vmem:[#allocation8 + $0x8] sm:$0xff]
    %v115 = vld [vmem:[#allocation8 + $0x10] sm:$0xff]
    %v116 = vld [vmem:[#allocation8 + $0x18] sm:$0xff]
    %v117 = vld [vmem:[%s5] sm:$0x1]
    %v118 = vld [vmem:[#allocation10] sm:$0xff]
    %v119 = vld [vmem:[#allocation10 + $0x8] sm:$0xff]
    %v120 = vld [vmem:[#allocation10 + $0x10] sm:$0xff]
    %v121 = vld [vmem:[#allocation10 + $0x18] sm:$0xff]
    %v122 = vld [vmem:[%s7] sm:$0x1]
    %v123 = vld [vmem:[#allocation2] sm:$0xff]
    %v124 = vld [vmem:[#allocation2 + $0x8] sm:$0xff]
    %vm125 = vcmask 261120
    %v126 = vsel %vm125, %v123, -inf
    %127 = vmax.xlane.f32.xlu0 %v126
    %v128 = vpop.xlane.xlu0 %127
    %v129 = vsel %vm125, %v124, -inf
    %130 = vmax.xlane.f32.xlu0 %v129
    %v131 = vpop.xlane.xlu0 %130
    %v132 = vsub.f32 %v123, %v128
    %v133 = vsub.f32 %v124, %v131
    %v134 = vmul.f32 %v132, 1.442695
    %v135 = vpow.pop %v134
    %v136 = vmul.f32 %v133, 1.442695
    %v137 = vpow.pop %v136
    %v138 = vsel %vm125, %v135, 0.0
    %139 = vadd.xlane.f32.xlu0 %v138
    %v140 = vpop.xlane.xlu0 %139
    %v141 = vsel %vm125, %v137, 0.0
    %142 = vadd.xlane.f32.xlu0 %v141
    %v143 = vpop.xlane.xlu0 %142
    %v144 = vrcp.pop %v140
    %v145 = vmul.f32 %v140, %v144
    %v146 = vsub.f32 1.0, %v145
    %v147 = vmul.f32 %v144, %v146
    %v148 = vadd.f32 %v144, %v147
    %vm149 = vweird.f32 %v140
    %vm150 = vweird.f32 %v144
    %vm151 = vmor %vm149, %vm150
    %v152 = vsel %vm151, %v144, %v148
    %v153 = vand.u32 2147483647, %v140
    %vm154 = vcmp.eq.f32.partialorder %v153, 8.507059e+37
    %v155 = vand.u32 %v140, 2147483648
    %v156 = vor.u32 1.1754944e-38, %v155
    %v157 = vsel %vm154, %v156, %v152
    %v158 = vrcp.pop %v143
    %v159 = vmul.f32 %v143, %v158
    %v160 = vsub.f32 1.0, %v159
    %v161 = vmul.f32 %v158, %v160
    %v162 = vadd.f32 %v158, %v161
    %vm163 = vweird.f32 %v143
    %vm164 = vweird.f32 %v158
    %vm165 = vmor %vm163, %vm164
    %v166 = vsel %vm165, %v158, %v162
    %v167 = vand.u32 2147483647, %v143
    %vm168 = vcmp.eq.f32.partialorder %v167, 8.507059e+37
    %v169 = vand.u32 %v143, 2147483648
    %v170 = vor.u32 1.1754944e-38, %v169
    %v171 = vsel %vm168, %v170, %v166
    %v173 = vsel %vm125, %v135, 0
    %v176 = vsel %vm125, %v137, 0
    %178 = vmatpush.msra.mxu0 0.0
    %179 = vmatpush.msra.mxu0 0.0
    %180 = vmatpush.msra.mxu0 0.0
    %181 = vmatpush.msra.mxu0 0.0
    %182 = vmatpush.msra.mxu0 0.0
    %183 = vmatpush.msra.mxu0 0.0
    %184 = vmatpush.msra.mxu0 0.0
    %185 = vmatpush.msra.mxu0 0.0
    %186 = vmatpush.msra.mxu0 0.0
    %187 = vmatpush.msra.mxu0 0.0
    %188 = vmatpush.msra.mxu0 0.0
    %189 = vmatpush.msra.mxu0 0.0
    %190 = vmatpush.msra.mxu0 %v111
    %191 = vmatpush.msra.mxu0 %v110
    %192 = vmatpush.msra.mxu0 %v109
    %193 = vmatpush.msra.mxu0 %v108
    %194 = vmatmul.f32.gmra.mxu0 %v173
    %v195 = vpop.f32.mrf.mxu0
    %v196 = vadd.f32 0.0, %v195
    %197 = vmatmul.f32.gmra.mxu0 %v176
    %v198 = vpop.f32.mrf.mxu0
    %v199 = vadd.f32 0.0, %v198
    %200 = vdwg.mxu0
    %v201 = vmul.f32 %v196, %v157
    %v202 = vmul.f32 %v199, %v171
    %v204 = vperm.slane %v112, 0
    %v206 = vadd.f32 %v201, %v204
    %v207 = vadd.f32 %v202, %v204
    %vm208 = vcmp.gt.f32.partialorder %v206, 1e-06
    %vm209 = vcmp.gt.f32.partialorder %v207, 1e-06
    %v210 = vsel %vm208, %v206, 0.0
    %v211 = vsel %vm209, %v207, 0.0
    %v212 = vld [vmem:[#allocation5] sm:$0xff]
    %v213 = vld [vmem:[#allocation5 + $0x8] sm:$0xff]
    %v214 = vadd.f32 %v212, %v204
    %v215 = vadd.f32 %v213, %v204
    %vm216 = vcmp.gt.f32.partialorder %v214, 1e-06
    %vm217 = vcmp.gt.f32.partialorder %v215, 1e-06
    %v218 = vsel %vm216, %v214, 0.0
    %v219 = vsel %vm217, %v215, 0.0
    %v221 = vperm.slane %v117, 0
    %v224 = vsel %vm125, %v210, 0
    %v227 = vsel %vm125, %v211, 0
    %v230 = vsel %vm125, %v218, 0
    %v233 = vsel %vm125, %v219, 0
    %235 = vmatpush.msra.mxu0 0.0
    %236 = vmatpush.msra.mxu0 0.0
    %237 = vmatpush.msra.mxu0 0.0
    %238 = vmatpush.msra.mxu0 0.0
    %239 = vmatpush.msra.mxu0 0.0
    %240 = vmatpush.msra.mxu0 0.0
    %241 = vmatpush.msra.mxu0 0.0
    %242 = vmatpush.msra.mxu0 0.0
    %243 = vmatpush.msra.mxu0 0.0
    %244 = vmatpush.msra.mxu0 0.0
    %245 = vmatpush.msra.mxu0 0.0
    %246 = vmatpush.msra.mxu0 0.0
    %247 = vmatpush.msra.mxu0 %v116
    %248 = vmatpush.msra.mxu0 %v115
    %249 = vmatpush.msra.mxu0 %v114
    %250 = vmatpush.msra.mxu0 %v113
    %251 = vmatmul.f32.gmra.mxu0 %v224
    %v252 = vpop.f32.mrf.mxu0
    %v253 = vadd.f32 %v221, %v252
    %254 = vmatmul.f32.gmra.mxu0 %v227
    %v255 = vpop.f32.mrf.mxu0
    %v256 = vadd.f32 %v221, %v255
    %257 = vmatmul.f32.gmra.mxu0 %v230
    %v258 = vpop.f32.mrf.mxu0
    %v259 = vadd.f32 %v221, %v258
    %260 = vmatmul.f32.gmra.mxu0 %v233
    %v261 = vpop.f32.mrf.mxu0
    %v262 = vadd.f32 %v221, %v261
    %263 = vdwg.mxu0
    %vm264 = vcmp.gt.f32.partialorder %v253, 1e-06
    %vm265 = vcmp.gt.f32.partialorder %v256, 1e-06
    %vm266 = vcmp.gt.f32.partialorder %v259, 1e-06
    %vm267 = vcmp.gt.f32.partialorder %v262, 1e-06
    %v268 = vsel %vm264, %v253, 0.0
    %v269 = vsel %vm265, %v256, 0.0
    %v270 = vsel %vm266, %v259, 0.0
    %v271 = vsel %vm267, %v262, 0.0
    %v273 = vperm.slane %v122, 0
    %v276 = vsel %vm125, %v268, 0
    %v279 = vsel %vm125, %v269, 0
    %v282 = vsel %vm125, %v270, 0
    %v285 = vsel %vm125, %v271, 0
    %287 = vmatpush.msra.mxu0 0.0
    %288 = vmatpush.msra.mxu0 0.0
    %289 = vmatpush.msra.mxu0 0.0
    %290 = vmatpush.msra.mxu0 0.0
    %291 = vmatpush.msra.mxu0 0.0
    %292 = vmatpush.msra.mxu0 0.0
    %293 = vmatpush.msra.mxu0 0.0
    %294 = vmatpush.msra.mxu0 0.0
    %295 = vmatpush.msra.mxu0 0.0
    %296 = vmatpush.msra.mxu0 0.0
    %297 = vmatpush.msra.mxu0 0.0
    %298 = vmatpush.msra.mxu0 0.0
    %299 = vmatpush.msra.mxu0 %v121
    %300 = vmatpush.msra.mxu0 %v120
    %301 = vmatpush.msra.mxu0 %v119
    %302 = vmatpush.msra.mxu0 %v118
    %303 = vmatmul.f32.gmra.mxu0 %v276
    %v304 = vpop.f32.mrf.mxu0
    %v305 = vadd.f32 %v273, %v304
    %306 = vmatmul.f32.gmra.mxu0 %v279
    %v307 = vpop.f32.mrf.mxu0
    %v308 = vadd.f32 %v273, %v307
    %309 = vmatmul.f32.gmra.mxu0 %v282
    %v310 = vpop.f32.mrf.mxu0
    %v311 = vadd.f32 %v273, %v310
    %312 = vmatmul.f32.gmra.mxu0 %v285
    %v313 = vpop.f32.mrf.mxu0
    %v314 = vadd.f32 %v273, %v313
    %315 = vdwg.mxu0
    %v317 = vrot.slane %v305, 1
    %v318 = vrot.slane %v305, 2
    %v319 = vrot.slane %v305, 3
    %v320 = vrot.slane %v305, 4
    %v321 = vrot.slane %v305, 5
    %v322 = vrot.slane %v305, 6
    %v323 = vrot.slane %v305, 7
    %331 = vst [vmem:[#allocation11] sm:$0x1] %v305
    %332 = vst [vmem:[#allocation11 + $0x8] sm:$0x1] %v317
    %333 = vst [vmem:[#allocation11 + $0x10] sm:$0x1] %v318
    %334 = vst [vmem:[#allocation11 + $0x18] sm:$0x1] %v319
    %335 = vst [vmem:[#allocation11 + $0x20] sm:$0x1] %v320
    %336 = vst [vmem:[#allocation11 + $0x28] sm:$0x1] %v321
    %337 = vst [vmem:[#allocation11 + $0x30] sm:$0x1] %v322
    %338 = vst [vmem:[#allocation11 + $0x38] sm:$0x1] %v323
    %v340 = vrot.slane %v308, 1
    %v341 = vrot.slane %v308, 2
    %v342 = vrot.slane %v308, 3
    %v343 = vrot.slane %v308, 4
    %v344 = vrot.slane %v308, 5
    %v345 = vrot.slane %v308, 6
    %v346 = vrot.slane %v308, 7
    %354 = vst [vmem:[#allocation11 + $0x1] sm:$0x1] %v308
    %355 = vst [vmem:[#allocation11 + $0x9] sm:$0x1] %v340
    %356 = vst [vmem:[#allocation11 + $0x11] sm:$0x1] %v341
    %357 = vst [vmem:[#allocation11 + $0x19] sm:$0x1] %v342
    %358 = vst [vmem:[#allocation11 + $0x21] sm:$0x1] %v343
    %359 = vst [vmem:[#allocation11 + $0x29] sm:$0x1] %v344
    %360 = vst [vmem:[#allocation11 + $0x31] sm:$0x1] %v345
    %361 = vst [vmem:[#allocation11 + $0x39] sm:$0x1] %v346
    %v363 = vrot.slane %v311, 1
    %v364 = vrot.slane %v311, 2
    %v365 = vrot.slane %v311, 3
    %v366 = vrot.slane %v311, 4
    %v367 = vrot.slane %v311, 5
    %v368 = vrot.slane %v311, 6
    %v369 = vrot.slane %v311, 7
    %377 = vst [vmem:[#allocation11 + $0x2] sm:$0x1] %v311
    %378 = vst [vmem:[#allocation11 + $0xa] sm:$0x1] %v363
    %379 = vst [vmem:[#allocation11 + $0x12] sm:$0x1] %v364
    %380 = vst [vmem:[#allocation11 + $0x1a] sm:$0x1] %v365
    %381 = vst [vmem:[#allocation11 + $0x22] sm:$0x1] %v366
    %382 = vst [vmem:[#allocation11 + $0x2a] sm:$0x1] %v367
    %383 = vst [vmem:[#allocation11 + $0x32] sm:$0x1] %v368
    %384 = vst [vmem:[#allocation11 + $0x3a] sm:$0x1] %v369
    %v386 = vrot.slane %v314, 1
    %v387 = vrot.slane %v314, 2
    %v388 = vrot.slane %v314, 3
    %v389 = vrot.slane %v314, 4
    %v390 = vrot.slane %v314, 5
    %v391 = vrot.slane %v314, 6
    %v392 = vrot.slane %v314, 7
    %400 = vst [vmem:[#allocation11 + $0x3] sm:$0x1] %v314
    %401 = vst [vmem:[#allocation11 + $0xb] sm:$0x1] %v386
    %402 = vst [vmem:[#allocation11 + $0x13] sm:$0x1] %v387
    %403 = vst [vmem:[#allocation11 + $0x1b] sm:$0x1] %v388
    %404 = vst [vmem:[#allocation11 + $0x23] sm:$0x1] %v389
    %405 = vst [vmem:[#allocation11 + $0x2b] sm:$0x1] %v390
    %406 = vst [vmem:[#allocation11 + $0x33] sm:$0x1] %v391
    %407 = vst [vmem:[#allocation11 + $0x3b] sm:$0x1] %v392
    %408 = vst [vmem:[#allocation11 + $0x4] sm:$0xf] 0.0
    %409 = vst [vmem:[#allocation11 + $0xc] sm:$0xf] 0.0
    %410 = vst [vmem:[#allocation11 + $0x14] sm:$0xf] 0.0
    %411 = vst [vmem:[#allocation11 + $0x1c] sm:$0xf] 0.0
    %412 = vst [vmem:[#allocation11 + $0x24] sm:$0xf] 0.0
    %413 = vst [vmem:[#allocation11 + $0x2c] sm:$0xf] 0.0
    %414 = vst [vmem:[#allocation11 + $0x34] sm:$0xf] 0.0
    %415 = vst [vmem:[#allocation11 + $0x3c] sm:$0xf] 0.0
    // Predicated region
    $region54: #{tpu_custom_call.1} parent=1 // pred_check
      _
    $region55: #{tpu_custom_call.1} parent=1 // pred_check_branch
      %417 = sbr.rel (0) target = $region57
    $region56: #{tpu_custom_call.1} parent=1 // pred_region
      %419 = vsyncadd [#allocation4], 0
      %s420 = sshll.u32 [#allocation11], 4
      %s421 = int_to_ptr.vmem [resolvable:$true] %s420
      %s422 = sshll.u32 %s8, 4
      %s423 = int_to_ptr.hbm [resolvable:$true] %s422
      %428 = dma.vmem_to_hbm [thread:$0]  %s421, 1024, %s423, [#allocation4], 128, 128, 8
    $region57: #{tpu_custom_call.1} parent=1 // pred_fallthru
      _
    // Predicated region
    $region58: #{tpu_custom_call.1} parent=1 // pred_check
      _
    $region59: #{tpu_custom_call.1} parent=1 // pred_check_branch
      %430 = sbr.rel (0) target = $region61
    $region60: #{tpu_custom_call.1} parent=1 // pred_region
      %432 = dma.done [#allocation4], 1024
    $region61: #{tpu_custom_call.1} parent=1 // pred_fallthru
      _
    %433 = vsyncpa [#allocation3], 1
    %434 = vsyncpa [#allocation6], 1
    %435 = vsyncpa [#allocation9], 1
    %436 = vsyncpa [#allocation4], 1

</llo_original>
